<compile_context>
chip_gen: v6e
topology: v6e:2x2x1
jax: 0.10.0
libtpu: 0.0.40
codegen_flags: <defaults>
</compile_context>

<pallas_src>
import functools

import numpy as np
import jax
import jax.numpy as jnp
from jax import lax
from jax.experimental import pallas as pl
from jax.experimental.pallas import tpu as pltpu


def _dragan_kernel(x_ref, noise_ref, w1_ref, alpha_ref, b1_ref, w2t_ref,
                   gp_ref,
                   hx_ref, hn_ref, gh_ref, sq_ref, ssum_ref, ssq_ref,
                   *, cpt, HW, n_elems, n_tiles, lmbda):
    phase = pl.program_id(0)   # 0: stats + forward matmuls, 1: backward + norm
    d = pl.program_id(1)       # channel-group tile index along flattened dim

    # ---------------- init (first iteration only) ----------------
    @pl.when((phase == 0) & (d == 0))
    def _init():
        ssum_ref[...] = jnp.zeros_like(ssum_ref)
        ssq_ref[...] = jnp.zeros_like(ssq_ref)
        hx_ref[...] = jnp.zeros_like(hx_ref)
        hn_ref[...] = jnp.zeros_like(hn_ref)
        sq_ref[...] = jnp.zeros_like(sq_ref)

    # ------ phase 0: ONE pass over x/noise tiles: stats + both matmuls ------
    @pl.when(phase == 0)
    def _forward():
        xb = x_ref[...]          # (B, tD)
        nb = noise_ref[...]      # (B, tD)
        w1b = w1_ref[...]        # (tD, Hd)
        ssum_ref[...] += jnp.sum(xb)
        ssq_ref[...] += jnp.sum(xb * xb)
        hx_ref[...] += jnp.dot(xb, w1b, preferred_element_type=jnp.float32)
        hn_ref[...] += jnp.dot(nb, w1b, preferred_element_type=jnp.float32)

    # ------ end of phase 0: std, fused interp (in h-space), relu' mask ------
    @pl.when((phase == 0) & (d == n_tiles - 1))
    def _finish_forward():
        s = ssum_ref[...]                                     # (1,1)
        ss = ssq_ref[...]                                     # (1,1)
        # torch.Tensor.std(): unbiased std over ALL elements of x (one-pass).
        var = (ss - s * s * (1.0 / n_elems)) / (n_elems - 1.0)
        std = jnp.sqrt(var)                                   # (1,1)
        coef = (1.0 - alpha_ref[...]) * (0.5 * std)           # (B,1)
        # h = (x + coef*noise) @ W1 + b1 == x@W1 + coef*(noise@W1) + b1
        h = hx_ref[...] + coef * hn_ref[...] + b1_ref[...]    # (B,Hd)
        # autograd.grad(dinterp, interp, ones) upstream term: relu'(h) * W2^T
        gh_ref[...] = jnp.where(h > 0.0, w2t_ref[...], 0.0)   # (B,Hd)

    # ------ phase 1: grad_c = g_h @ W1_c^T fused with channel-norm accum ----
    @pl.when(phase == 1)
    def _backward():
        w1b = w1_ref[...]        # (tD, Hd)
        gh = gh_ref[...]         # (B, Hd)
        acc = sq_ref[...]        # (B, HW)
        for c in range(cpt):     # static, tiny; never materializes (B, D) grad
            w1c = w1b[c * HW:(c + 1) * HW, :]                 # (HW, Hd)
            gc = lax.dot_general(gh, w1c,
                                 dimension_numbers=(((1,), (1,)), ((), ())),
                                 preferred_element_type=jnp.float32)  # (B,HW)
            acc = acc + gc * gc
        sq_ref[...] = acc

    # ---------------- finalize ----------------
    @pl.when((phase == 1) & (d == n_tiles - 1))
    def _finish():
        norm = jnp.sqrt(sq_ref[...])                          # L2 over channels
        gp = lmbda * jnp.mean((norm - 1.0) ** 2)
        gp_ref[...] = jnp.broadcast_to(gp, (1, 1))


def dragan_penalty(x_nchw, alpha, noise, w1, b1, w2, lmbda=10.0,
                   channels_per_tile=None):
    """x_nchw: (B,C,H,W) f32; alpha: (B,1); noise: (B,C,H,W); disc params W1/b1/W2."""
    B, C, H, W = x_nchw.shape
    HW = H * W
    D = C * HW
    Hd = w1.shape[1]

    x2 = x_nchw.reshape(B, D).astype(jnp.float32)
    noise2 = noise.reshape(B, D).astype(jnp.float32)
    w1f = w1.astype(jnp.float32)
    alpha2 = alpha.reshape(B, 1).astype(jnp.float32)
    b1_2 = b1.reshape(1, Hd).astype(jnp.float32)
    w2t = w2.reshape(1, Hd).astype(jnp.float32)    # (Hd,1) -> (1,Hd), same order

    # ---- tile selection: whole channels per tile, lane-aligned tiles ----
    if channels_per_tile is None:
        # Budget ~16 MiB for the double-buffered (x, noise, w1) tiles so the
        # kernel fits every generation's default scoped-VMEM limit
        # (v5e 16 MiB / v6e 32 MiB / v7x 32 MiB scoped, 64 MiB physical).
        budget = 16 << 20
        t_d_max = max(HW, budget // (2 * 4 * (2 * B + Hd)))
        cpt = max(1, t_d_max // HW)
    else:
        cpt = int(channels_per_tile)
    if HW % 128 != 0:
        # TODO(synk): pad HW (and the matching W1 rows) to a multiple of 128 to
        #             allow lane-aligned multi-tile grids for odd spatial sizes.
        cpt = C
    cpt = max(1, min(cpt, C))
    while C % cpt:
        cpt -= 1
    n_tiles = C // cpt
    t_d = cpt * HW

    kernel = functools.partial(_dragan_kernel, cpt=cpt, HW=HW,
                               n_elems=float(B * D), n_tiles=n_tiles,
                               lmbda=float(lmbda))

    # x/noise are only read in phase 0; pin their block index during phase 1 so
    # the pipeline does not re-fetch them from HBM in the backward pass.
    def xn_map(p, d):
        return (0, d + p * (n_tiles - 1 - d))

    gp = pl.pallas_call(
        kernel,
        out_shape=jax.ShapeDtypeStruct((1, 1), jnp.float32),
        grid_spec=pltpu.PrefetchScalarGridSpec(
            num_scalar_prefetch=0,
            grid=(2, n_tiles),                                   # (phase, tile)
            in_specs=[
                pl.BlockSpec((B, t_d), xn_map),                  # x
                pl.BlockSpec((B, t_d), xn_map),                  # noise
                pl.BlockSpec((t_d, Hd), lambda p, d: (d, 0)),    # W1
                pl.BlockSpec((B, 1), lambda p, d: (0, 0)),       # alpha
                pl.BlockSpec((1, Hd), lambda p, d: (0, 0)),      # b1
                pl.BlockSpec((1, Hd), lambda p, d: (0, 0)),      # W2^T
            ],
            out_specs=pl.BlockSpec((1, 1), lambda p, d: (0, 0)),
            scratch_shapes=[
                pltpu.VMEM((B, Hd), jnp.float32),   # x @ W1 accumulator
                pltpu.VMEM((B, Hd), jnp.float32),   # noise @ W1 accumulator
                pltpu.VMEM((B, Hd), jnp.float32),   # relu'(h) * W2^T
                pltpu.VMEM((B, HW), jnp.float32),   # per-(b,hw) sum of grad^2
                pltpu.VMEM((1, 1), jnp.float32),    # sum(x)
                pltpu.VMEM((1, 1), jnp.float32),    # sum(x*x)
            ],
        ),
        compiler_params=pltpu.CompilerParams(
            # Both grid axes carry sequential accumulation / phase dependency.
            # TODO(synk): on v7x a 'parallel' batch axis with per-core partial
            #             penalties (reduced in the wrapper) would use the 2nd TC.
            dimension_semantics=("arbitrary", "arbitrary"),
            vmem_limit_bytes=32 * 1024 * 1024,
        ),
    )(x2, noise2, w1f, alpha2, b1_2, w2t)
    return gp[0, 0]


# ----------------------------- pure-JAX reference ----------------------------
def _ref_penalty(x, alpha, noise, w1, b1, w2, b2, lmbda):
    B, C, H, W = x.shape
    D = C * H * W
    n = x.size
    mean = jnp.mean(x)
    std = jnp.sqrt(jnp.sum((x - mean) ** 2) / (n - 1))
    a4 = alpha.reshape(B, 1, 1, 1)
    interp = a4 * x + (1.0 - a4) * (x + 0.5 * std * noise)
    flat = interp.reshape(B, D)

    def f(z):
        h = z @ w1 + b1.reshape(1, -1)
        out = jnp.maximum(h, 0.0) @ w2 + b2          # (B, 1)
        return jnp.sum(out)                          # grad_outputs = ones

    grads = jax.grad(f)(flat).reshape(B, C, H, W)
    norm = jnp.sqrt(jnp.sum(grads ** 2, axis=1))     # norm over dim=1 (channels)
    return lmbda * jnp.mean((norm - 1.0) ** 2)


if __name__ == "__main__":
    B, C, H, W = 2, 4, 16, 16
    D = C * H * W
    HIDDEN = 32
    LMBDA = 10.0

    key = jax.random.PRNGKey(0)
    kx, ka, kn, k1, kb1, k2, kb2 = jax.random.split(key, 7)

    x = jax.random.normal(kx, (B, C, H, W), jnp.float32)
    alpha = jax.random.uniform(ka, (B, 1), jnp.float32)          # torch.rand(bs,1)
    noise = jax.random.uniform(kn, (B, C, H, W), jnp.float32)    # torch.rand(x.shape)

    # deterministic synthetic discriminator parameters
    w1 = 0.05 * jax.random.normal(k1, (D, HIDDEN), jnp.float32)
    b1 = 0.05 * jax.random.normal(kb1, (HIDDEN,), jnp.float32)
    w2 = 0.05 * jax.random.normal(k2, (HIDDEN, 1), jnp.float32)
    b2 = 0.05 * jax.random.normal(kb2, (1,), jnp.float32)        # unused by penalty

    # channels_per_tile=2 -> a (2 phase x 2 tile) grid so the pipelined
    # multi-tile accumulation path is exercised even at this tiny test shape.
    gp = dragan_penalty(x, alpha, noise, w1, b1, w2, lmbda=LMBDA,
                        channels_per_tile=2)
    gp = jax.block_until_ready(gp)

    gp_ref = _ref_penalty(x, alpha, noise, w1, b1, w2, b2, LMBDA)
    np.testing.assert_allclose(np.asarray(gp), np.asarray(gp_ref),
                               rtol=1e-5, atol=1e-5)
    print("KERNEL_OK")
</pallas_src>

<mosaic_0001>
module attributes {stable_mosaic.version = 11 : i64} {
  func.func @_dragan_kernel(%arg0: i32, %arg1: i32, %arg2: memref<2x512xf32, #tpu.memory_space<vmem>>, %arg3: memref<2x512xf32, #tpu.memory_space<vmem>>, %arg4: memref<512x32xf32, #tpu.memory_space<vmem>>, %arg5: memref<2x1xf32, #tpu.memory_space<vmem>>, %arg6: memref<1x32xf32, #tpu.memory_space<vmem>>, %arg7: memref<1x32xf32, #tpu.memory_space<vmem>>, %arg8: memref<1x1xf32, #tpu.memory_space<vmem>>, %arg9: memref<2x32xf32, #tpu.memory_space<vmem>>, %arg10: memref<2x32xf32, #tpu.memory_space<vmem>>, %arg11: memref<2x32xf32, #tpu.memory_space<vmem>>, %arg12: memref<2x256xf32, #tpu.memory_space<vmem>>, %arg13: memref<1x1xf32, #tpu.memory_space<vmem>>, %arg14: memref<1x1xf32, #tpu.memory_space<vmem>>) attributes {dimension_semantics = [#tpu.dimension_semantics<arbitrary>, #tpu.dimension_semantics<arbitrary>], iteration_bounds = array<i64: 2, 2>, scalar_prefetch = 0 : i64, scratch_operands = 6 : i64, tpu.core_type = #tpu.core_type<tc>, window_params = [{transform_indices = @transform_0, window_bounds = array<i64: 2, 512>}, {transform_indices = @transform_1, window_bounds = array<i64: 2, 512>}, {transform_indices = @transform_2, window_bounds = array<i64: 512, 32>}, {pipeline_mode = #tpu.pipeline_mode<synchronous>, transform_indices = @transform_3, window_bounds = array<i64: 2, 1>}, {pipeline_mode = #tpu.pipeline_mode<synchronous>, transform_indices = @transform_4, window_bounds = array<i64: 1, 32>}, {pipeline_mode = #tpu.pipeline_mode<synchronous>, transform_indices = @transform_5, window_bounds = array<i64: 1, 32>}, {pipeline_mode = #tpu.pipeline_mode<synchronous>, transform_indices = @transform_6, window_bounds = array<i64: 1, 1>}]} {
    %c0_i32 = arith.constant 0 : i32
    %0 = arith.cmpi eq, %arg0, %c0_i32 : i32
    %c0_i32_0 = arith.constant 0 : i32
    %1 = arith.cmpi eq, %arg1, %c0_i32_0 : i32
    %2 = arith.andi %0, %1 : i1
    %3 = arith.extui %2 : i1 to i32
    %c0_i32_1 = arith.constant 0 : i32
    %4 = arith.cmpi ne, %3, %c0_i32_1 : i32
    scf.if %4 {
      %cst = arith.constant 0.000000e+00 : f32
      %21 = vector.broadcast %cst : f32 to vector<1x1xf32>
      %c0 = arith.constant 0 : index
      %c0_11 = arith.constant 0 : index
      %22 = vector.load %arg13[%c0, %c0_11] : memref<1x1xf32, #tpu.memory_space<vmem>>, vector<1x1xf32>
      tpu.vector_store %arg13[%c0, %c0_11], %21 {strides = array<i32>} : memref<1x1xf32, #tpu.memory_space<vmem>>, vector<1x1xf32>,
      %cst_12 = arith.constant 0.000000e+00 : f32
      %23 = vector.broadcast %cst_12 : f32 to vector<1x1xf32>
      %c0_13 = arith.constant 0 : index
      %c0_14 = arith.constant 0 : index
      %24 = vector.load %arg14[%c0_13, %c0_14] : memref<1x1xf32, #tpu.memory_space<vmem>>, vector<1x1xf32>
      tpu.vector_store %arg14[%c0_13, %c0_14], %23 {strides = array<i32>} : memref<1x1xf32, #tpu.memory_space<vmem>>, vector<1x1xf32>,
      %cst_15 = arith.constant 0.000000e+00 : f32
      %25 = vector.broadcast %cst_15 : f32 to vector<2x32xf32>
      %c0_16 = arith.constant 0 : index
      %c0_17 = arith.constant 0 : index
      %26 = vector.load %arg9[%c0_16, %c0_17] : memref<2x32xf32, #tpu.memory_space<vmem>>, vector<2x32xf32>
      tpu.vector_store %arg9[%c0_16, %c0_17], %25 {strides = array<i32>} : memref<2x32xf32, #tpu.memory_space<vmem>>, vector<2x32xf32>,
      %cst_18 = arith.constant 0.000000e+00 : f32
      %27 = vector.broadcast %cst_18 : f32 to vector<2x32xf32>
      %c0_19 = arith.constant 0 : index
      %c0_20 = arith.constant 0 : index
      %28 = vector.load %arg10[%c0_19, %c0_20] : memref<2x32xf32, #tpu.memory_space<vmem>>, vector<2x32xf32>
      tpu.vector_store %arg10[%c0_19, %c0_20], %27 {strides = array<i32>} : memref<2x32xf32, #tpu.memory_space<vmem>>, vector<2x32xf32>,
      %cst_21 = arith.constant 0.000000e+00 : f32
      %29 = vector.broadcast %cst_21 : f32 to vector<2x256xf32>
      %c0_22 = arith.constant 0 : index
      %c0_23 = arith.constant 0 : index
      %30 = vector.load %arg12[%c0_22, %c0_23] : memref<2x256xf32, #tpu.memory_space<vmem>>, vector<2x256xf32>
      tpu.vector_store %arg12[%c0_22, %c0_23], %29 {strides = array<i32>} : memref<2x256xf32, #tpu.memory_space<vmem>>, vector<2x256xf32>,
    } else {
    }
    %c0_i32_2 = arith.constant 0 : i32
    %5 = arith.cmpi eq, %arg0, %c0_i32_2 : i32
    %6 = arith.extui %5 : i1 to i32
    %c0_i32_3 = arith.constant 0 : i32
    %7 = arith.cmpi ne, %6, %c0_i32_3 : i32
    scf.if %7 {
      %c0 = arith.constant 0 : index
      %c0_11 = arith.constant 0 : index
      %21 = vector.load %arg2[%c0, %c0_11] : memref<2x512xf32, #tpu.memory_space<vmem>>, vector<2x512xf32>
      %c0_12 = arith.constant 0 : index
      %c0_13 = arith.constant 0 : index
      %22 = vector.load %arg3[%c0_12, %c0_13] : memref<2x512xf32, #tpu.memory_space<vmem>>, vector<2x512xf32>
      %c0_14 = arith.constant 0 : index
      %c0_15 = arith.constant 0 : index
      %23 = vector.load %arg4[%c0_14, %c0_15] : memref<512x32xf32, #tpu.memory_space<vmem>>, vector<512x32xf32>
      %c0_16 = arith.constant 0 : index
      %c0_17 = arith.constant 0 : index
      %24 = vector.load %arg13[%c0_16, %c0_17] : memref<1x1xf32, #tpu.memory_space<vmem>>, vector<1x1xf32>
      %25 = vector.shape_cast %21 : vector<2x512xf32> to vector<1x2x512xf32>
      %cst = arith.constant dense<0.000000e+00> : vector<1xf32>
      %26 = vector.multi_reduction <add>, %25, %cst [1, 2] : vector<1x2x512xf32> to vector<1xf32>
      %27 = vector.shape_cast %26 : vector<1xf32> to vector<1x1x1xf32>
      %28 = vector.extract %27[0, 0, 0] : f32 from vector<1x1x1xf32>
      %29 = vector.broadcast %28 : f32 to vector<1x1xf32>
      %30 = arith.addf %24, %29 : vector<1x1xf32>
      %c0_18 = arith.constant 0 : index
      %c0_19 = arith.constant 0 : index
      %31 = vector.load %arg13[%c0_18, %c0_19] : memref<1x1xf32, #tpu.memory_space<vmem>>, vector<1x1xf32>
      tpu.vector_store %arg13[%c0_18, %c0_19], %30 {strides = array<i32>} : memref<1x1xf32, #tpu.memory_space<vmem>>, vector<1x1xf32>,
      %c0_20 = arith.constant 0 : index
      %c0_21 = arith.constant 0 : index
      %32 = vector.load %arg14[%c0_20, %c0_21] : memref<1x1xf32, #tpu.memory_space<vmem>>, vector<1x1xf32>
      %33 = arith.mulf %21, %21 : vector<2x512xf32>
      %34 = vector.shape_cast %33 : vector<2x512xf32> to vector<1x2x512xf32>
      %cst_22 = arith.constant dense<0.000000e+00> : vector<1xf32>
      %35 = vector.multi_reduction <add>, %34, %cst_22 [1, 2] : vector<1x2x512xf32> to vector<1xf32>
      %36 = vector.shape_cast %35 : vector<1xf32> to vector<1x1x1xf32>
      %37 = vector.extract %36[0, 0, 0] : f32 from vector<1x1x1xf32>
      %38 = vector.broadcast %37 : f32 to vector<1x1xf32>
      %39 = arith.addf %32, %38 : vector<1x1xf32>
      %c0_23 = arith.constant 0 : index
      %c0_24 = arith.constant 0 : index
      %40 = vector.load %arg14[%c0_23, %c0_24] : memref<1x1xf32, #tpu.memory_space<vmem>>, vector<1x1xf32>
      tpu.vector_store %arg14[%c0_23, %c0_24], %39 {strides = array<i32>} : memref<1x1xf32, #tpu.memory_space<vmem>>, vector<1x1xf32>,
      %c0_25 = arith.constant 0 : index
      %c0_26 = arith.constant 0 : index
      %41 = vector.load %arg9[%c0_25, %c0_26] : memref<2x32xf32, #tpu.memory_space<vmem>>, vector<2x32xf32>
      %cst_27 = arith.constant dense<0.000000e+00> : vector<2x32xf32>
      %42 = tpu.matmul %21, %23, %cst_27 {dimension_numbers = #tpu.dot_dimension_numbers<[1], [0], [0], [1], [0, 0, 1, 1], [], []>} : vector<2x512xf32>, vector<512x32xf32>, vector<2x32xf32> -> vector<2x32xf32>
      %43 = arith.addf %41, %42 : vector<2x32xf32>
      %c0_28 = arith.constant 0 : index
      %c0_29 = arith.constant 0 : index
      %44 = vector.load %arg9[%c0_28, %c0_29] : memref<2x32xf32, #tpu.memory_space<vmem>>, vector<2x32xf32>
      tpu.vector_store %arg9[%c0_28, %c0_29], %43 {strides = array<i32>} : memref<2x32xf32, #tpu.memory_space<vmem>>, vector<2x32xf32>,
      %c0_30 = arith.constant 0 : index
      %c0_31 = arith.constant 0 : index
      %45 = vector.load %arg10[%c0_30, %c0_31] : memref<2x32xf32, #tpu.memory_space<vmem>>, vector<2x32xf32>
      %cst_32 = arith.constant dense<0.000000e+00> : vector<2x32xf32>
      %46 = tpu.matmul %22, %23, %cst_32 {dimension_numbers = #tpu.dot_dimension_numbers<[1], [0], [0], [1], [0, 0, 1, 1], [], []>} : vector<2x512xf32>, vector<512x32xf32>, vector<2x32xf32> -> vector<2x32xf32>
      %47 = arith.addf %45, %46 : vector<2x32xf32>
      %c0_33 = arith.constant 0 : index
      %c0_34 = arith.constant 0 : index
      %48 = vector.load %arg10[%c0_33, %c0_34] : memref<2x32xf32, #tpu.memory_space<vmem>>, vector<2x32xf32>
      tpu.vector_store %arg10[%c0_33, %c0_34], %47 {strides = array<i32>} : memref<2x32xf32, #tpu.memory_space<vmem>>, vector<2x32xf32>,
    } else {
    }
    %c0_i32_4 = arith.constant 0 : i32
    %8 = arith.cmpi eq, %arg0, %c0_i32_4 : i32
    %c1_i32 = arith.constant 1 : i32
    %9 = arith.cmpi eq, %arg1, %c1_i32 : i32
    %10 = arith.andi %8, %9 : i1
    %11 = arith.extui %10 : i1 to i32
    %c0_i32_5 = arith.constant 0 : i32
    %12 = arith.cmpi ne, %11, %c0_i32_5 : i32
    scf.if %12 {
      %c0 = arith.constant 0 : index
      %c0_11 = arith.constant 0 : index
      %21 = vector.load %arg13[%c0, %c0_11] : memref<1x1xf32, #tpu.memory_space<vmem>>, vector<1x1xf32>
      %c0_12 = arith.constant 0 : index
      %c0_13 = arith.constant 0 : index
      %22 = vector.load %arg14[%c0_12, %c0_13] : memref<1x1xf32, #tpu.memory_space<vmem>>, vector<1x1xf32>
      %23 = arith.mulf %21, %21 : vector<1x1xf32>
      %cst = arith.constant 4.8828125E-4 : f32
      %24 = vector.broadcast %cst : f32 to vector<1x1xf32>
      %25 = arith.mulf %23, %24 : vector<1x1xf32>
      %26 = arith.subf %22, %25 : vector<1x1xf32>
      %cst_14 = arith.constant 2.047000e+03 : f32
      %27 = vector.broadcast %cst_14 : f32 to vector<1x1xf32>
      %28 = arith.divf %26, %27 : vector<1x1xf32>
      %29 = math.sqrt %28 : vector<1x1xf32>
      %c0_15 = arith.constant 0 : index
      %c0_16 = arith.constant 0 : index
      %30 = vector.load %arg5[%c0_15, %c0_16] : memref<2x1xf32, #tpu.memory_space<vmem>>, vector<2x1xf32>
      %cst_17 = arith.constant 1.000000e+00 : f32
      %31 = vector.broadcast %cst_17 : f32 to vector<2x1xf32>
      %32 = arith.subf %31, %30 : vector<2x1xf32>
      %cst_18 = arith.constant 5.000000e-01 : f32
      %33 = vector.broadcast %cst_18 : f32 to vector<1x1xf32>
      %34 = arith.mulf %33, %29 : vector<1x1xf32>
      %35 = vector.broadcast %34 : vector<1x1xf32> to vector<2x1xf32>
      %36 = arith.mulf %32, %35 : vector<2x1xf32>
      %c0_19 = arith.constant 0 : index
      %c0_20 = arith.constant 0 : index
      %37 = vector.load %arg9[%c0_19, %c0_20] : memref<2x32xf32, #tpu.memory_space<vmem>>, vector<2x32xf32>
      %c0_21 = arith.constant 0 : index
      %c0_22 = arith.constant 0 : index
      %38 = vector.load %arg10[%c0_21, %c0_22] : memref<2x32xf32, #tpu.memory_space<vmem>>, vector<2x32xf32>
      %39 = vector.broadcast %36 : vector<2x1xf32> to vector<2x32xf32>
      %40 = arith.mulf %39, %38 : vector<2x32xf32>
      %41 = arith.addf %37, %40 : vector<2x32xf32>
      %c0_23 = arith.constant 0 : index
      %c0_24 = arith.constant 0 : index
      %42 = vector.load %arg6[%c0_23, %c0_24] : memref<1x32xf32, #tpu.memory_space<vmem>>, vector<1x32xf32>
      %43 = vector.broadcast %42 : vector<1x32xf32> to vector<2x32xf32>
      %44 = arith.addf %41, %43 : vector<2x32xf32>
      %cst_25 = arith.constant 0.000000e+00 : f32
      %45 = vector.broadcast %cst_25 : f32 to vector<2x32xf32>
      %46 = arith.cmpf ogt, %44, %45 : vector<2x32xf32>
      %c0_26 = arith.constant 0 : index
      %c0_27 = arith.constant 0 : index
      %47 = vector.load %arg7[%c0_26, %c0_27] : memref<1x32xf32, #tpu.memory_space<vmem>>, vector<1x32xf32>
      %cst_28 = arith.constant 0.000000e+00 : f32
      %48 = vector.shape_cast %47 : vector<1x32xf32> to vector<1x32xf32>
      %49 = vector.broadcast %48 : vector<1x32xf32> to vector<2x32xf32>
      %50 = vector.broadcast %cst_28 : f32 to vector<2x32xf32>
      %51 = arith.select %46, %49, %50 : vector<2x32xi1>, vector<2x32xf32>
      %c0_29 = arith.constant 0 : index
      %c0_30 = arith.constant 0 : index
      %52 = vector.load %arg11[%c0_29, %c0_30] : memref<2x32xf32, #tpu.memory_space<vmem>>, vector<2x32xf32>
      tpu.vector_store %arg11[%c0_29, %c0_30], %51 {strides = array<i32>} : memref<2x32xf32, #tpu.memory_space<vmem>>, vector<2x32xf32>,
    } else {
    }
    %c1_i32_6 = arith.constant 1 : i32
    %13 = arith.cmpi eq, %arg0, %c1_i32_6 : i32
    %14 = arith.extui %13 : i1 to i32
    %c0_i32_7 = arith.constant 0 : i32
    %15 = arith.cmpi ne, %14, %c0_i32_7 : i32
    scf.if %15 {
      %c0 = arith.constant 0 : index
      %c0_11 = arith.constant 0 : index
      %21 = vector.load %arg4[%c0, %c0_11] : memref<512x32xf32, #tpu.memory_space<vmem>>, vector<512x32xf32>
      %c0_12 = arith.constant 0 : index
      %c0_13 = arith.constant 0 : index
      %22 = vector.load %arg11[%c0_12, %c0_13] : memref<2x32xf32, #tpu.memory_space<vmem>>, vector<2x32xf32>
      %c0_14 = arith.constant 0 : index
      %c0_15 = arith.constant 0 : index
      %23 = vector.load %arg12[%c0_14, %c0_15] : memref<2x256xf32, #tpu.memory_space<vmem>>, vector<2x256xf32>
      %24 = vector.extract_strided_slice %21 {offsets = [0, 0], sizes = [256, 32], strides = [1, 1]} : vector<512x32xf32> to vector<256x32xf32>
      %cst = arith.constant dense<0.000000e+00> : vector<2x256xf32>
      %25 = tpu.matmul %22, %24, %cst {dimension_numbers = #tpu.dot_dimension_numbers<[1], [1], [0], [0], [0, 0, 1, 0], [], []>} : vector<2x32xf32>, vector<256x32xf32>, vector<2x256xf32> -> vector<2x256xf32>
      %26 = arith.mulf %25, %25 : vector<2x256xf32>
      %27 = arith.addf %23, %26 : vector<2x256xf32>
      %28 = vector.extract_strided_slice %21 {offsets = [256, 0], sizes = [256, 32], strides = [1, 1]} : vector<512x32xf32> to vector<256x32xf32>
      %cst_16 = arith.constant dense<0.000000e+00> : vector<2x256xf32>
      %29 = tpu.matmul %22, %28, %cst_16 {dimension_numbers = #tpu.dot_dimension_numbers<[1], [1], [0], [0], [0, 0, 1, 0], [], []>} : vector<2x32xf32>, vector<256x32xf32>, vector<2x256xf32> -> vector<2x256xf32>
      %30 = arith.mulf %29, %29 : vector<2x256xf32>
      %31 = arith.addf %27, %30 : vector<2x256xf32>
      %c0_17 = arith.constant 0 : index
      %c0_18 = arith.constant 0 : index
      %32 = vector.load %arg12[%c0_17, %c0_18] : memref<2x256xf32, #tpu.memory_space<vmem>>, vector<2x256xf32>
      tpu.vector_store %arg12[%c0_17, %c0_18], %31 {strides = array<i32>} : memref<2x256xf32, #tpu.memory_space<vmem>>, vector<2x256xf32>,
    } else {
    }
    %c1_i32_8 = arith.constant 1 : i32
    %16 = arith.cmpi eq, %arg0, %c1_i32_8 : i32
    %c1_i32_9 = arith.constant 1 : i32
    %17 = arith.cmpi eq, %arg1, %c1_i32_9 : i32
    %18 = arith.andi %16, %17 : i1
    %19 = arith.extui %18 : i1 to i32
    %c0_i32_10 = arith.constant 0 : i32
    %20 = arith.cmpi ne, %19, %c0_i32_10 : i32
    scf.if %20 {
      %c0 = arith.constant 0 : index
      %c0_11 = arith.constant 0 : index
      %21 = vector.load %arg12[%c0, %c0_11] : memref<2x256xf32, #tpu.memory_space<vmem>>, vector<2x256xf32>
      %22 = math.sqrt %21 : vector<2x256xf32>
      %cst = arith.constant 1.000000e+00 : f32
      %23 = vector.broadcast %cst : f32 to vector<2x256xf32>
      %24 = arith.subf %22, %23 : vector<2x256xf32>
      %25 = arith.mulf %24, %24 : vector<2x256xf32>
      %26 = vector.shape_cast %25 : vector<2x256xf32> to vector<1x2x256xf32>
      %cst_12 = arith.constant dense<0.000000e+00> : vector<1xf32>
      %27 = vector.multi_reduction <add>, %26, %cst_12 [1, 2] : vector<1x2x256xf32> to vector<1xf32>
      %28 = vector.shape_cast %27 : vector<1xf32> to vector<1x1x1xf32>
      %29 = vector.extract %28[0, 0, 0] : f32 from vector<1x1x1xf32>
      %cst_13 = arith.constant 5.120000e+02 : f32
      %30 = arith.divf %29, %cst_13 : f32
      %cst_14 = arith.constant 1.000000e+01 : f32
      %31 = arith.mulf %cst_14, %30 : f32
      %32 = vector.broadcast %31 : f32 to vector<1x1xf32>
      %c0_15 = arith.constant 0 : index
      %c0_16 = arith.constant 0 : index
      %33 = vector.load %arg8[%c0_15, %c0_16] : memref<1x1xf32, #tpu.memory_space<vmem>>, vector<1x1xf32>
      tpu.vector_store %arg8[%c0_15, %c0_16], %32 {strides = array<i32>} : memref<1x1xf32, #tpu.memory_space<vmem>>, vector<1x1xf32>,
    } else {
    }
    return
  }
  func.func @transform_0(%arg0: i32, %arg1: i32) -> (i32, i32) {
    %c1_i32 = arith.constant 1 : i32
    %0 = arith.subi %c1_i32, %arg1 : i32
    %1 = arith.muli %arg0, %0 : i32
    %2 = arith.addi %arg1, %1 : i32
    %c0_i32 = arith.constant 0 : i32
    %c0_i32_0 = arith.constant 0 : i32
    return %c0_i32, %2 : i32, i32
  }
  func.func @transform_1(%arg0: i32, %arg1: i32) -> (i32, i32) {
    %c1_i32 = arith.constant 1 : i32
    %0 = arith.subi %c1_i32, %arg1 : i32
    %1 = arith.muli %arg0, %0 : i32
    %2 = arith.addi %arg1, %1 : i32
    %c0_i32 = arith.constant 0 : i32
    %c0_i32_0 = arith.constant 0 : i32
    return %c0_i32, %2 : i32, i32
  }
  func.func @transform_2(%arg0: i32, %arg1: i32) -> (i32, i32) {
    %c0_i32 = arith.constant 0 : i32
    %c0_i32_0 = arith.constant 0 : i32
    return %arg1, %c0_i32 : i32, i32
  }
  func.func @transform_3(%arg0: i32, %arg1: i32) -> (i32, i32) {
    %c0_i32 = arith.constant 0 : i32
    %c0_i32_0 = arith.constant 0 : i32
    %c0_i32_1 = arith.constant 0 : i32
    return %c0_i32, %c0_i32_0 : i32, i32
  }
  func.func @transform_4(%arg0: i32, %arg1: i32) -> (i32, i32) {
    %c0_i32 = arith.constant 0 : i32
    %c0_i32_0 = arith.constant 0 : i32
    %c0_i32_1 = arith.constant 0 : i32
    return %c0_i32, %c0_i32_0 : i32, i32
  }
  func.func @transform_5(%arg0: i32, %arg1: i32) -> (i32, i32) {
    %c0_i32 = arith.constant 0 : i32
    %c0_i32_0 = arith.constant 0 : i32
    %c0_i32_1 = arith.constant 0 : i32
    return %c0_i32, %c0_i32_0 : i32, i32
  }
  func.func @transform_6(%arg0: i32, %arg1: i32) -> (i32, i32) {
    %c0_i32 = arith.constant 0 : i32
    %c0_i32_0 = arith.constant 0 : i32
    %c0_i32_1 = arith.constant 0 : i32
    return %c0_i32, %c0_i32_0 : i32, i32
  }
}

</mosaic_0001>

<llo_original>
// kernel: tpu_custom_call.1
$region0: #{tpu_custom_call.1}
  #allocation0 [shape = 'u32[]', space=smem, size = 0x4, offset = 0x4, fixed_abs, tag = 'smem constant byte address 0x4 - core index']
  #allocation1 [shape = 'u32[144,128]{1,0:T(1,128)}', space=vmem, size = 0x12000, scoped, tag = 'internal scratch']
  #allocation2 [shape = 'f32[2,32]{1,0:T(2,128)}', space=vmem, size = 0x400, scoped, tag = 'scratch operand']
  #allocation3 [shape = 'f32[2,32]{1,0:T(2,128)}', space=vmem, size = 0x400, scoped, tag = 'scratch operand']
  #allocation4 [shape = 'f32[2,32]{1,0:T(2,128)}', space=vmem, size = 0x400, scoped, tag = 'scratch operand']
  #allocation5 [shape = 'f32[2,256]{1,0:T(2,128)}', space=vmem, size = 0x800, scoped, tag = 'scratch operand']
  #allocation6 [shape = 'f32[1,1]{1,0:T(1,128)}', space=vmem, size = 0x200, scoped, tag = 'scratch operand']
  #allocation7 [shape = 'f32[1,1]{1,0:T(1,128)}', space=vmem, size = 0x200, scoped, tag = 'scratch operand']
  %s0 = inlined_call_operand.vmem [shape: f32[2,1024], index: 0, kind: input, shape index: {}]
  %s1 = inlined_call_operand.vmem [shape: f32[2,1024], index: 1, kind: input, shape index: {}]
  %s2 = inlined_call_operand.vmem [shape: f32[1024,32], index: 2, kind: input, shape index: {}]
  %s3 = inlined_call_operand.vmem [shape: f32[2,1], index: 3, kind: input, shape index: {}]
  %s4 = inlined_call_operand.vmem [shape: f32[1,32], index: 4, kind: input, shape index: {}]
  %s5 = inlined_call_operand.vmem [shape: f32[1,32], index: 5, kind: input, shape index: {}]
  %s6 = inlined_call_operand.hbm [shape: f32[1,1], index: 6, kind: output, shape index: {}]
  %s7 = sld [smem:[#allocation0]]
  $region77: #{tpu_custom_call.1} parent=0
    _
  %s9 = ssub.s32 1, %s7
  %s10 = scalar_select 0, %s9, %s7
  $region1: #{tpu_custom_call.1} parent=0
    #allocation8 [shape = 'u8[512]{0}', space=vmem, size = 0x400, scoped, tag = 'output window, operand 0, single buffered']
    #allocation9 [shape = 's32[2]{0}', space=sflag, size = 0x8, scoped, tag = 'scoped memory for tpu_custom_call.1']
    %11 = vsyncpa [#allocation9], 0
    loop: start=0, step=1, limit=6
    $region2: #{tpu_custom_call.1} parent=1 // loop_pre_header
      _
    $region3: #{tpu_custom_call.1} parent=1 // loop_header
      %s13 = sphi 0, %s17
      %p14 = scmp.ge.s32.totalorder %s13, 6
      %s20 = sphi 0, %s32
      %s21 = sphi 0, %s28
      %s22 = sphi 0, %s20
      %s23 = sphi 0, %s21
      %s24 = sphi 0, %s22
      %s25 = sphi 0, %s23
      %s41 = sphi 0, %s43
      %s44 = sphi 0, %s41
      %s45 = sphi 0, %s44
      %s61 = sphi 0, %s45
      %s73 = sphi 0, %s75
      %s76 = sphi 0, %s73
      %s77 = sphi 0, %s76
      %s93 = sphi 0, %s77
      %s99 = sphi 0, %s101
      %s102 = sphi 0, %s99
      %s103 = sphi 0, %s102
      %s119 = sphi 0, %s103
      %s123 = sphi 0, %s123
      %s125 = sphi 0, %s123
      %s126 = sphi 0, %s125
      %s140 = sphi 0, %s126
      %s144 = sphi 0, %s144
      %s146 = sphi 0, %s144
      %s147 = sphi 0, %s146
      %s161 = sphi 0, %s147
      %s165 = sphi 0, %s165
      %s167 = sphi 0, %s165
      %s168 = sphi 0, %s167
      %s182 = sphi 0, %s168
      %s186 = sphi 0, %s186
      %s188 = sphi 0, %s186
      %s189 = sphi 0, %s188
      %s203 = sphi 0, %s189
    $region4: #{tpu_custom_call.1} parent=1 // loop_header_branch
      %16 = sbr.rel (%p14) target = $region8
    $region5: #{tpu_custom_call.1} parent=1 // loop_body
      %s18 = ssub.s32 %s13, 1
      %s19 = ssub.s32 %s13, 2
      %s26 = sadd.s32 1, %s21
      %p27 = scmp.ge.s32.totalorder %s26, 2
      %s28 = scalar_select %p27, 0, %s26
      %s29 = sadd.s32 1, %s20
      %s30 = scalar_select %p27, %s29, %s20
      %p31 = scmp.ge.s32.totalorder %s30, 2
      %s32 = scalar_select %p31, 0, %s30
      %s33 = ssub.s32 1, %s21
      %s34 = smul.u32 %s20, %s33
      %s35 = sadd.s32 %s21, %s34
      %s36 = ssub.s32 1, %s28
      %s37 = smul.u32 %s32, %s36
      %s38 = sadd.s32 %s28, %s37
      %s39 = ssub.s32 %s35, %s38
      %p40 = scmp.eq.s32.totalorder %s39, 0
      %s42 = sadd.s32 %s41, 1
      %s43 = scalar_select %p40, %s41, %s42
      %p46 = pneg %p40
      %p47 = scmp.eq.s32.totalorder %s13, 3
      %p48 = por %p46, %p47
      %p49 = scmp.ne.s32.totalorder %s41, %s44
      %p50 = scmp.eq.s32.totalorder %s13, 0
      %p51 = por %p49, %p50
      %p52 = scmp.ne.s32.totalorder %s41, %s44
      %p53 = scmp.eq.s32.totalorder %s18, 3
      %p54 = por %p52, %p53
      %p55 = scmp.ne.s32.totalorder %s44, %s45
      %p56 = scmp.eq.s32.totalorder %s18, 0
      %p57 = por %p55, %p56
      %p58 = scmp.ne.s32.totalorder %s44, %s45
      %p59 = scmp.eq.s32.totalorder %s19, 3
      %p60 = por %p58, %p59
      %p62 = scmp.ne.s32.totalorder %s45, %s61
      %p63 = scmp.eq.s32.totalorder %s19, 0
      %p64 = por %p62, %p63
      %s65 = ssub.s32 1, %s21
      %s66 = smul.u32 %s20, %s65
      %s67 = sadd.s32 %s21, %s66
      %s68 = ssub.s32 1, %s28
      %s69 = smul.u32 %s32, %s68
      %s70 = sadd.s32 %s28, %s69
      %s71 = ssub.s32 %s67, %s70
      %p72 = scmp.eq.s32.totalorder %s71, 0
      %s74 = sadd.s32 %s73, 1
      %s75 = scalar_select %p72, %s73, %s74
      %p78 = pneg %p72
      %p79 = scmp.eq.s32.totalorder %s13, 3
      %p80 = por %p78, %p79
      %p81 = scmp.ne.s32.totalorder %s73, %s76
      %p82 = scmp.eq.s32.totalorder %s13, 0
      %p83 = por %p81, %p82
      %p84 = scmp.ne.s32.totalorder %s73, %s76
      %p85 = scmp.eq.s32.totalorder %s18, 3
      %p86 = por %p84, %p85
      %p87 = scmp.ne.s32.totalorder %s76, %s77
      %p88 = scmp.eq.s32.totalorder %s18, 0
      %p89 = por %p87, %p88
      %p90 = scmp.ne.s32.totalorder %s76, %s77
      %p91 = scmp.eq.s32.totalorder %s19, 3
      %p92 = por %p90, %p91
      %p94 = scmp.ne.s32.totalorder %s77, %s93
      %p95 = scmp.eq.s32.totalorder %s19, 0
      %p96 = por %p94, %p95
      %s97 = ssub.s32 %s21, %s28
      %p98 = scmp.eq.s32.totalorder %s97, 0
      %s100 = sadd.s32 %s99, 1
      %s101 = scalar_select %p98, %s99, %s100
      %p104 = pneg %p98
      %p105 = scmp.eq.s32.totalorder %s13, 3
      %p106 = por %p104, %p105
      %p107 = scmp.ne.s32.totalorder %s99, %s102
      %p108 = scmp.eq.s32.totalorder %s13, 0
      %p109 = por %p107, %p108
      %p110 = scmp.ne.s32.totalorder %s99, %s102
      %p111 = scmp.eq.s32.totalorder %s18, 3
      %p112 = por %p110, %p111
      %p113 = scmp.ne.s32.totalorder %s102, %s103
      %p114 = scmp.eq.s32.totalorder %s18, 0
      %p115 = por %p113, %p114
      %p116 = scmp.ne.s32.totalorder %s102, %s103
      %p117 = scmp.eq.s32.totalorder %s19, 3
      %p118 = por %p116, %p117
      %p120 = scmp.ne.s32.totalorder %s103, %s119
      %p121 = scmp.eq.s32.totalorder %s19, 0
      %p122 = por %p120, %p121
      %s124 = sadd.s32 %s123, 1
      %p127 = scmp.eq.s32.totalorder %s13, 3
      %p128 = scmp.ne.s32.totalorder %s123, %s125
      %p129 = scmp.eq.s32.totalorder %s13, 0
      %p130 = por %p128, %p129
      %p131 = scmp.ne.s32.totalorder %s123, %s125
      %p132 = scmp.eq.s32.totalorder %s18, 3
      %p133 = por %p131, %p132
      %p134 = scmp.ne.s32.totalorder %s125, %s126
      %p135 = scmp.eq.s32.totalorder %s18, 0
      %p136 = por %p134, %p135
      %p137 = scmp.ne.s32.totalorder %s125, %s126
      %p138 = scmp.eq.s32.totalorder %s19, 3
      %p139 = por %p137, %p138
      %p141 = scmp.ne.s32.totalorder %s126, %s140
      %p142 = scmp.eq.s32.totalorder %s19, 0
      %p143 = por %p141, %p142
      %s145 = sadd.s32 %s144, 1
      %p148 = scmp.eq.s32.totalorder %s13, 3
      %p149 = scmp.ne.s32.totalorder %s144, %s146
      %p150 = scmp.eq.s32.totalorder %s13, 0
      %p151 = por %p149, %p150
      %p152 = scmp.ne.s32.totalorder %s144, %s146
      %p153 = scmp.eq.s32.totalorder %s18, 3
      %p154 = por %p152, %p153
      %p155 = scmp.ne.s32.totalorder %s146, %s147
      %p156 = scmp.eq.s32.totalorder %s18, 0
      %p157 = por %p155, %p156
      %p158 = scmp.ne.s32.totalorder %s146, %s147
      %p159 = scmp.eq.s32.totalorder %s19, 3
      %p160 = por %p158, %p159
      %p162 = scmp.ne.s32.totalorder %s147, %s161
      %p163 = scmp.eq.s32.totalorder %s19, 0
      %p164 = por %p162, %p163
      %s166 = sadd.s32 %s165, 1
      %p169 = scmp.eq.s32.totalorder %s13, 3
      %p170 = scmp.ne.s32.totalorder %s165, %s167
      %p171 = scmp.eq.s32.totalorder %s13, 0
      %p172 = por %p170, %p171
      %p173 = scmp.ne.s32.totalorder %s165, %s167
      %p174 = scmp.eq.s32.totalorder %s18, 3
      %p175 = por %p173, %p174
      %p176 = scmp.ne.s32.totalorder %s167, %s168
      %p177 = scmp.eq.s32.totalorder %s18, 0
      %p178 = por %p176, %p177
      %p179 = scmp.ne.s32.totalorder %s167, %s168
      %p180 = scmp.eq.s32.totalorder %s19, 3
      %p181 = por %p179, %p180
      %p183 = scmp.ne.s32.totalorder %s168, %s182
      %p184 = scmp.eq.s32.totalorder %s19, 0
      %p185 = por %p183, %p184
      %s187 = sadd.s32 %s186, 1
      %p190 = scmp.eq.s32.totalorder %s13, 3
      %p191 = scmp.ne.s32.totalorder %s186, %s188
      %p192 = scmp.eq.s32.totalorder %s13, 0
      %p193 = por %p191, %p192
      %p194 = scmp.ne.s32.totalorder %s186, %s188
      %p195 = scmp.eq.s32.totalorder %s18, 3
      %p196 = por %p194, %p195
      %p197 = scmp.ne.s32.totalorder %s188, %s189
      %p198 = scmp.eq.s32.totalorder %s18, 0
      %p199 = por %p197, %p198
      %p200 = scmp.ne.s32.totalorder %s188, %s189
      %p201 = scmp.eq.s32.totalorder %s19, 3
      %p202 = por %p200, %p201
      %p204 = scmp.ne.s32.totalorder %s189, %s203
      %p205 = scmp.eq.s32.totalorder %s19, 0
      %p206 = por %p204, %p205
      %p207 = scmp.le.s32.totalorder 1, %s13
      %p208 = scmp.lt.s32.totalorder %s13, 5
      %p209 = pnand %p207, %p208
      %p210 = pneg %p209
      // Predicated region
      $region9: #{tpu_custom_call.1} parent=5 // pred_check
        _
      $region10: #{tpu_custom_call.1} parent=5 // pred_check_branch
        %212 = sbr.rel (%p209) target = $region12
      $region11: #{tpu_custom_call.1} parent=5 // pred_region
        %s213 = ssub.s32 %s13, 1
        // Predicated region
        $region13: #{tpu_custom_call.1} parent=11 // pred_check
          %p214 = pneg %p136
        $region14: #{tpu_custom_call.1} parent=11 // pred_check_branch
          %216 = sbr.rel (%p214) target = $region16
        $region15: #{tpu_custom_call.1} parent=11 // pred_region
          _
        $region16: #{tpu_custom_call.1} parent=11 // pred_fallthru
          _
        // Predicated region
        $region17: #{tpu_custom_call.1} parent=11 // pred_check
          %p217 = pneg %p157
        $region18: #{tpu_custom_call.1} parent=11 // pred_check_branch
          %219 = sbr.rel (%p217) target = $region20
        $region19: #{tpu_custom_call.1} parent=11 // pred_region
          _
        $region20: #{tpu_custom_call.1} parent=11 // pred_fallthru
          _
        // Predicated region
        $region21: #{tpu_custom_call.1} parent=11 // pred_check
          %p220 = pneg %p178
        $region22: #{tpu_custom_call.1} parent=11 // pred_check_branch
          %222 = sbr.rel (%p220) target = $region24
        $region23: #{tpu_custom_call.1} parent=11 // pred_region
          _
        $region24: #{tpu_custom_call.1} parent=11 // pred_fallthru
          _
      $region12: #{tpu_custom_call.1} parent=5 // pred_fallthru
        _
      %p223 = scmp.lt.s32.totalorder %s13, 4
      // Predicated region
      $region25: #{tpu_custom_call.1} parent=5 // pred_check
        %p224 = pneg %p223
      $region26: #{tpu_custom_call.1} parent=5 // pred_check_branch
        %226 = sbr.rel (%p224) target = $region28
      $region27: #{tpu_custom_call.1} parent=5 // pred_region
        // Predicated region
        $region29: #{tpu_custom_call.1} parent=27 // pred_check
          %p227 = pneg %p51
        $region30: #{tpu_custom_call.1} parent=27 // pred_check_branch
          %229 = sbr.rel (%p227) target = $region32
        $region31: #{tpu_custom_call.1} parent=27 // pred_region
          %s230 = ssub.s32 1, %s21
          %s231 = smul.u32 %s20, %s230
          %s232 = sadd.s32 %s21, %s231
          %s233 = smul.u32 4, %s232
          %p234 = scmp.lt.s32.totalorder %s233, 7
          %s235 = scalar_select %p234, %s233, 7
          %s236 = smul.addr %s235, 2
          %s237 = scalar_lea.vmem %s0, %s236
          %s238 = ssub.s32 1, %s21
          %s239 = smul.u32 %s20, %s238
          %s240 = sadd.s32 %s21, %s239
          %s241 = smul.u32 4, %s240
        $region32: #{tpu_custom_call.1} parent=27 // pred_fallthru
          _
        // Predicated region
        $region33: #{tpu_custom_call.1} parent=27 // pred_check
          %p242 = pneg %p83
        $region34: #{tpu_custom_call.1} parent=27 // pred_check_branch
          %244 = sbr.rel (%p242) target = $region36
        $region35: #{tpu_custom_call.1} parent=27 // pred_region
          %s245 = ssub.s32 1, %s21
          %s246 = smul.u32 %s20, %s245
          %s247 = sadd.s32 %s21, %s246
          %s248 = smul.u32 4, %s247
          %p249 = scmp.lt.s32.totalorder %s248, 7
          %s250 = scalar_select %p249, %s248, 7
          %s251 = smul.addr %s250, 2
          %s252 = scalar_lea.vmem %s1, %s251
          %s253 = ssub.s32 1, %s21
          %s254 = smul.u32 %s20, %s253
          %s255 = sadd.s32 %s21, %s254
          %s256 = smul.u32 4, %s255
        $region36: #{tpu_custom_call.1} parent=27 // pred_fallthru
          _
        // Predicated region
        $region37: #{tpu_custom_call.1} parent=27 // pred_check
          %p257 = pneg %p109
        $region38: #{tpu_custom_call.1} parent=27 // pred_check_branch
          %259 = sbr.rel (%p257) target = $region40
        $region39: #{tpu_custom_call.1} parent=27 // pred_region
          %s260 = smul.u32 64, %s21
          %p261 = scmp.lt.s32.totalorder %s260, 127
          %s262 = scalar_select %p261, %s260, 127
          %s263 = smul.addr %s262, 8
          %s264 = scalar_lea.vmem %s2, %s263
          %s265 = smul.u32 64, %s21
        $region40: #{tpu_custom_call.1} parent=27 // pred_fallthru
          _
      $region28: #{tpu_custom_call.1} parent=5 // pred_fallthru
        _
      %p266 = scmp.le.s32.totalorder 1, %s13
      %p267 = scmp.lt.s32.totalorder %s13, 5
      %p268 = pnand %p266, %p267
      %p269 = pneg %p268
      // Predicated region
      $region41: #{tpu_custom_call.1} parent=5 // pred_check
        _
      $region42: #{tpu_custom_call.1} parent=5 // pred_check_branch
        %271 = sbr.rel (%p268) target = $region44
      $region43: #{tpu_custom_call.1} parent=5 // pred_region
        %s272 = ssub.s32 %s13, 1
        %s273 = ssub.s32 1, %s23
        %s274 = smul.u32 %s22, %s273
        %s275 = sadd.s32 %s23, %s274
        %s276 = smul.u32 4, %s275
        %p277 = scmp.lt.s32.totalorder %s276, 7
        %s278 = scalar_select %p277, %s276, 7
        %s279 = smul.addr %s278, 2
        %s280 = scalar_lea.vmem %s0, %s279
        %p281 = pneg %p57
        %p282 = pneg %p54
        %s283 = ssub.s32 1, %s23
        %s284 = smul.u32 %s22, %s283
        %s285 = sadd.s32 %s23, %s284
        %s286 = smul.u32 4, %s285
        %p287 = scmp.lt.s32.totalorder %s286, 7
        %s288 = scalar_select %p287, %s286, 7
        %s289 = smul.addr %s288, 2
        %s290 = scalar_lea.vmem %s1, %s289
        %p291 = pneg %p89
        %p292 = pneg %p86
        %s293 = smul.u32 64, %s23
        %p294 = scmp.lt.s32.totalorder %s293, 127
        %s295 = scalar_select %p294, %s293, 127
        %s296 = smul.addr %s295, 8
        %s297 = scalar_lea.vmem %s2, %s296
        %p298 = pneg %p115
        %p299 = pneg %p112
        %p300 = pneg %p136
        %p301 = pneg %p133
        %p302 = pneg %p157
        %p303 = pneg %p154
        %p304 = pneg %p178
        %p305 = pneg %p175
        %p306 = pneg %p199
        %p307 = pneg %p196
        %s308 = ssub.s32 1, %s23
        %s309 = smul.u32 %s22, %s308
        %s310 = sadd.s32 %s23, %s309
        %s311 = smul.u32 4, %s310
        %p312 = scmp.lt.s32.totalorder %s311, 7
        %s313 = scalar_select %p312, %s311, 7
        %s314 = smul.addr %s313, 2
        %s315 = scalar_lea.vmem %s0, %s314
        %s316 = ssub.s32 1, %s23
        %s317 = smul.u32 %s22, %s316
        %s318 = sadd.s32 %s23, %s317
        %s319 = smul.u32 4, %s318
        %s320 = ssub.s32 1, %s23
        %s321 = smul.u32 %s22, %s320
        %s322 = sadd.s32 %s23, %s321
        %s323 = smul.u32 4, %s322
        %p324 = scmp.lt.s32.totalorder %s323, 7
        %s325 = scalar_select %p324, %s323, 7
        %s326 = smul.addr %s325, 2
        %s327 = scalar_lea.vmem %s1, %s326
        %s328 = ssub.s32 1, %s23
        %s329 = smul.u32 %s22, %s328
        %s330 = sadd.s32 %s23, %s329
        %s331 = smul.u32 4, %s330
        %s332 = smul.u32 64, %s23
        %p333 = scmp.lt.s32.totalorder %s332, 127
        %s334 = scalar_select %p333, %s332, 127
        %s335 = smul.addr %s334, 8
        %s336 = scalar_lea.vmem %s2, %s335
        %s337 = smul.u32 64, %s23
        %p338 = scmp.eq.s32.totalorder %s22, 0
        %p339 = scmp.eq.s32.totalorder %s23, 0
        %p340 = pnand %p338, %p339
        %p341 = pneg %p340
        // Predicated region
        $region45: #{tpu_custom_call.1} parent=43 // pred_check
          _
        $region46: #{tpu_custom_call.1} parent=43 // pred_check_branch
          %343 = sbr.rel (%p340) target = $region48
        $region47: #{tpu_custom_call.1} parent=43 // pred_region
          %vm344 = vcmask 0
          %345 = vst.msk [vmem:[#allocation6] sm:$0x1] %vm344, 0.0
          %346 = vst.msk [vmem:[#allocation7] sm:$0x1] %vm344, 0.0
          %vm347 = vcmask 254976
          %348 = vst.msk [vmem:[#allocation2] sm:$0x3] %vm347, 0.0
          %349 = vst.msk [vmem:[#allocation3] sm:$0x3] %vm347, 0.0
          %350 = vst [vmem:[#allocation5] sm:$0xf] 0.0
        $region48: #{tpu_custom_call.1} parent=43 // pred_fallthru
          _
        // Predicated region
        $region49: #{tpu_custom_call.1} parent=43 // pred_check
          %p351 = pneg %p338
        $region50: #{tpu_custom_call.1} parent=43 // pred_check_branch
          %353 = sbr.rel (%p351) target = $region52
        $region51: #{tpu_custom_call.1} parent=43 // pred_region
          %v354 = vld [vmem:[%s315] sm:$0xff]
          %v355 = vld [vmem:[%s327] sm:$0xff]
          %v356 = vld [vmem:[%s336] sm:$0xff]
          %v357 = vld [vmem:[%s336 + $0x8] sm:$0xff]
          %v358 = vld [vmem:[%s336 + $0x10] sm:$0xff]
          %v359 = vld [vmem:[%s336 + $0x18] sm:$0xff]
          %v360 = vld [vmem:[%s336 + $0x20] sm:$0xff]
          %v361 = vld [vmem:[%s336 + $0x28] sm:$0xff]
          %v362 = vld [vmem:[%s336 + $0x30] sm:$0xff]
          %v363 = vld [vmem:[%s336 + $0x38] sm:$0xff]
          %v364 = vld [vmem:[%s336 + $0x40] sm:$0xff]
          %v365 = vld [vmem:[%s336 + $0x48] sm:$0xff]
          %v366 = vld [vmem:[%s336 + $0x50] sm:$0xff]
          %v367 = vld [vmem:[%s336 + $0x58] sm:$0xff]
          %v368 = vld [vmem:[%s336 + $0x60] sm:$0xff]
          %v369 = vld [vmem:[%s336 + $0x68] sm:$0xff]
          %v370 = vld [vmem:[%s336 + $0x70] sm:$0xff]
          %v371 = vld [vmem:[%s336 + $0x78] sm:$0xff]
          %v372 = vld [vmem:[%s336 + $0x80] sm:$0xff]
          %v373 = vld [vmem:[%s336 + $0x88] sm:$0xff]
          %v374 = vld [vmem:[%s336 + $0x90] sm:$0xff]
          %v375 = vld [vmem:[%s336 + $0x98] sm:$0xff]
          %v376 = vld [vmem:[%s336 + $0xa0] sm:$0xff]
          %v377 = vld [vmem:[%s336 + $0xa8] sm:$0xff]
          %v378 = vld [vmem:[%s336 + $0xb0] sm:$0xff]
          %v379 = vld [vmem:[%s336 + $0xb8] sm:$0xff]
          %v380 = vld [vmem:[%s336 + $0xc0] sm:$0xff]
          %v381 = vld [vmem:[%s336 + $0xc8] sm:$0xff]
          %v382 = vld [vmem:[%s336 + $0xd0] sm:$0xff]
          %v383 = vld [vmem:[%s336 + $0xd8] sm:$0xff]
          %v384 = vld [vmem:[%s336 + $0xe0] sm:$0xff]
          %v385 = vld [vmem:[%s336 + $0xe8] sm:$0xff]
          %v386 = vld [vmem:[%s336 + $0xf0] sm:$0xff]
          %v387 = vld [vmem:[%s336 + $0xf8] sm:$0xff]
          %v388 = vld [vmem:[%s336 + $0x100] sm:$0xff]
          %v389 = vld [vmem:[%s336 + $0x108] sm:$0xff]
          %v390 = vld [vmem:[%s336 + $0x110] sm:$0xff]
          %v391 = vld [vmem:[%s336 + $0x118] sm:$0xff]
          %v392 = vld [vmem:[%s336 + $0x120] sm:$0xff]
          %v393 = vld [vmem:[%s336 + $0x128] sm:$0xff]
          %v394 = vld [vmem:[%s336 + $0x130] sm:$0xff]
          %v395 = vld [vmem:[%s336 + $0x138] sm:$0xff]
          %v396 = vld [vmem:[%s336 + $0x140] sm:$0xff]
          %v397 = vld [vmem:[%s336 + $0x148] sm:$0xff]
          %v398 = vld [vmem:[%s336 + $0x150] sm:$0xff]
          %v399 = vld [vmem:[%s336 + $0x158] sm:$0xff]
          %v400 = vld [vmem:[%s336 + $0x160] sm:$0xff]
          %v401 = vld [vmem:[%s336 + $0x168] sm:$0xff]
          %v402 = vld [vmem:[%s336 + $0x170] sm:$0xff]
          %v403 = vld [vmem:[%s336 + $0x178] sm:$0xff]
          %v404 = vld [vmem:[%s336 + $0x180] sm:$0xff]
          %v405 = vld [vmem:[%s336 + $0x188] sm:$0xff]
          %v406 = vld [vmem:[%s336 + $0x190] sm:$0xff]
          %v407 = vld [vmem:[%s336 + $0x198] sm:$0xff]
          %v408 = vld [vmem:[%s336 + $0x1a0] sm:$0xff]
          %v409 = vld [vmem:[%s336 + $0x1a8] sm:$0xff]
          %v410 = vld [vmem:[%s336 + $0x1b0] sm:$0xff]
          %v411 = vld [vmem:[%s336 + $0x1b8] sm:$0xff]
          %v412 = vld [vmem:[%s336 + $0x1c0] sm:$0xff]
          %v413 = vld [vmem:[%s336 + $0x1c8] sm:$0xff]
          %v414 = vld [vmem:[%s336 + $0x1d0] sm:$0xff]
          %v415 = vld [vmem:[%s336 + $0x1d8] sm:$0xff]
          %v416 = vld [vmem:[%s336 + $0x1e0] sm:$0xff]
          %v417 = vld [vmem:[%s336 + $0x1e8] sm:$0xff]
          %v418 = vld [vmem:[%s336 + $0x1f0] sm:$0xff]
          %v419 = vld [vmem:[%s336 + $0x1f8] sm:$0xff]
          %v420 = vld [vmem:[#allocation6] sm:$0x1]
          %v422 = vcombine.high %v354, %v354
          %v424 = vunpack.c.l.s4 1983009808
          %v425 = vunpack.c.0.s8 %v424
          %v426 = vlaneseq
          %v427 = vshrl.u32 %v426, 7
          %v428 = vsub.s32 %v425, %v427
          %v429 = vrot.slane %v354, %v428
          %v431 = vunpack.c.l.s4 1983009808
          %v432 = vunpack.c.0.s8 %v431
          %v433 = vlaneseq
          %v434 = vshrl.u32 %v433, 7
          %v435 = vsub.s32 %v432, %v434
          %v436 = vrot.slane %v422, %v435
          %v437 = vcombine.high %v429, %v429
          %v438 = vcombine.high %v436, %v436
          %vm443 = vcmask 1041408
          %v444 = vsel %vm443, %v429, 0.0
          %v445 = vsel %vm443, %v437, 0.0
          %v446 = vadd.f32 %v444, %v445
          %v447 = vsel %vm443, %v436, 0.0
          %v448 = vadd.f32 %v446, %v447
          %v449 = vsel %vm443, %v438, 0.0
          %v450 = vadd.f32 %v448, %v449
          %451 = vadd.xlane.f32.xlu0 %v450
          %v452 = vpop.xlane.xlu0 %451
          %v453 = vrot.slane %v452, 4
          %v454 = vadd.f32 %v452, %v453
          %v455 = vrot.slane %v454, 2
          %v456 = vadd.f32 %v454, %v455
          %v457 = vrot.slane %v456, 1
          %v458 = vadd.f32 %v456, %v457
          %s459 = vtos %v458
          %v460 = vstv %s459
          %v461 = vadd.f32 %v420, %v460
          %vm462 = vcmask 0
          %463 = vst.msk [vmem:[#allocation6] sm:$0x1] %vm462, %v461
          %v464 = vld [vmem:[#allocation7] sm:$0x1]
          %v465 = vmul.f32 %v354, %v354
          %v467 = vcombine.high %v465, %v465
          %v469 = vunpack.c.l.s4 1983009808
          %v470 = vunpack.c.0.s8 %v469
          %v471 = vlaneseq
          %v472 = vshrl.u32 %v471, 7
          %v473 = vsub.s32 %v470, %v472
          %v474 = vrot.slane %v465, %v473
          %v476 = vunpack.c.l.s4 1983009808
          %v477 = vunpack.c.0.s8 %v476
          %v478 = vlaneseq
          %v479 = vshrl.u32 %v478, 7
          %v480 = vsub.s32 %v477, %v479
          %v481 = vrot.slane %v467, %v480
          %v482 = vcombine.high %v474, %v474
          %v483 = vcombine.high %v481, %v481
          %v488 = vsel %vm443, %v474, 0.0
          %v489 = vsel %vm443, %v482, 0.0
          %v490 = vadd.f32 %v488, %v489
          %v491 = vsel %vm443, %v481, 0.0
          %v492 = vadd.f32 %v490, %v491
          %v493 = vsel %vm443, %v483, 0.0
          %v494 = vadd.f32 %v492, %v493
          %495 = vadd.xlane.f32.xlu0 %v494
          %v496 = vpop.xlane.xlu0 %495
          %v497 = vrot.slane %v496, 4
          %v498 = vadd.f32 %v496, %v497
          %v499 = vrot.slane %v498, 2
          %v500 = vadd.f32 %v498, %v499
          %v501 = vrot.slane %v500, 1
          %v502 = vadd.f32 %v500, %v501
          %s503 = vtos %v502
          %v504 = vstv %s503
          %v505 = vadd.f32 %v464, %v504
          %506 = vst.msk [vmem:[#allocation7] sm:$0x1] %vm462, %v505
          %v507 = vld [vmem:[#allocation2] sm:$0x3]
          %508 = vmatprep.subr.mxu0 0.0
          %509 = vmatpush1.msra.mxu0 %v371
          %510 = vmatprep.subr.mxu0 0.0
          %511 = vmatpush1.msra.mxu0 %v370
          %512 = vmatprep.subr.mxu0 0.0
          %513 = vmatpush1.msra.mxu0 %v369
          %514 = vmatprep.subr.mxu0 0.0
          %515 = vmatpush1.msra.mxu0 %v368
          %516 = vmatprep.subr.mxu0 0.0
          %517 = vmatpush1.msra.mxu0 %v367
          %518 = vmatprep.subr.mxu0 0.0
          %519 = vmatpush1.msra.mxu0 %v366
          %520 = vmatprep.subr.mxu0 0.0
          %521 = vmatpush1.msra.mxu0 %v365
          %522 = vmatprep.subr.mxu0 0.0
          %523 = vmatpush1.msra.mxu0 %v364
          %524 = vmatprep.subr.mxu0 0.0
          %525 = vmatpush1.msra.mxu0 %v363
          %526 = vmatprep.subr.mxu0 0.0
          %527 = vmatpush1.msra.mxu0 %v362
          %528 = vmatprep.subr.mxu0 0.0
          %529 = vmatpush1.msra.mxu0 %v361
          %530 = vmatprep.subr.mxu0 0.0
          %531 = vmatpush1.msra.mxu0 %v360
          %532 = vmatprep.subr.mxu0 0.0
          %533 = vmatpush1.msra.mxu0 %v359
          %534 = vmatprep.subr.mxu0 0.0
          %535 = vmatpush1.msra.mxu0 %v358
          %536 = vmatprep.subr.mxu0 0.0
          %537 = vmatpush1.msra.mxu0 %v357
          %538 = vmatprep.subr.mxu0 0.0
          %539 = vmatpush1.msra.mxu0 %v356
          %540 = vmatprep.subr.mxu0 0.0
          %541 = vmatpush2.msra.mxu0 %v387
          %542 = vmatprep.subr.mxu0 0.0
          %543 = vmatpush2.msra.mxu0 %v386
          %544 = vmatprep.subr.mxu0 0.0
          %545 = vmatpush2.msra.mxu0 %v385
          %546 = vmatprep.subr.mxu0 0.0
          %547 = vmatpush2.msra.mxu0 %v384
          %548 = vmatprep.subr.mxu0 0.0
          %549 = vmatpush2.msra.mxu0 %v383
          %550 = vmatprep.subr.mxu0 0.0
          %551 = vmatpush2.msra.mxu0 %v382
          %552 = vmatprep.subr.mxu0 0.0
          %553 = vmatpush2.msra.mxu0 %v381
          %554 = vmatprep.subr.mxu0 0.0
          %555 = vmatpush2.msra.mxu0 %v380
          %556 = vmatprep.subr.mxu0 0.0
          %557 = vmatpush2.msra.mxu0 %v379
          %558 = vmatprep.subr.mxu0 0.0
          %559 = vmatpush2.msra.mxu0 %v378
          %560 = vmatprep.subr.mxu0 0.0
          %561 = vmatpush2.msra.mxu0 %v377
          %562 = vmatprep.subr.mxu0 0.0
          %563 = vmatpush2.msra.mxu0 %v376
          %564 = vmatprep.subr.mxu0 0.0
          %565 = vmatpush2.msra.mxu0 %v375
          %566 = vmatprep.subr.mxu0 0.0
          %567 = vmatpush2.msra.mxu0 %v374
          %568 = vmatprep.subr.mxu0 0.0
          %569 = vmatpush2.msra.mxu0 %v373
          %570 = vmatprep.subr.mxu0 0.0
          %571 = vmatpush2.msra.mxu0 %v372
          %572 = vmatprep.mubr.f32.mxu0 %v437
          %573 = vmatmul.mubr.f32.gmra.mxu0 %v429
          %v574 = vpop.f32.mrf.mxu0
          %v575 = vadd.f32 0.0, %v574
          %v576 = vpop.f32.mrf.mxu0
          %577 = vdwg.mxu0
          %578 = vmatprep.subr.mxu0 0.0
          %579 = vmatpush1.msra.mxu0 %v403
          %580 = vmatprep.subr.mxu0 0.0
          %581 = vmatpush1.msra.mxu0 %v402
          %582 = vmatprep.subr.mxu0 0.0
          %583 = vmatpush1.msra.mxu0 %v401
          %584 = vmatprep.subr.mxu0 0.0
          %585 = vmatpush1.msra.mxu0 %v400
          %586 = vmatprep.subr.mxu0 0.0
          %587 = vmatpush1.msra.mxu0 %v399
          %588 = vmatprep.subr.mxu0 0.0
          %589 = vmatpush1.msra.mxu0 %v398
          %590 = vmatprep.subr.mxu0 0.0
          %591 = vmatpush1.msra.mxu0 %v397
          %592 = vmatprep.subr.mxu0 0.0
          %593 = vmatpush1.msra.mxu0 %v396
          %594 = vmatprep.subr.mxu0 0.0
          %595 = vmatpush1.msra.mxu0 %v395
          %596 = vmatprep.subr.mxu0 0.0
          %597 = vmatpush1.msra.mxu0 %v394
          %598 = vmatprep.subr.mxu0 0.0
          %599 = vmatpush1.msra.mxu0 %v393
          %600 = vmatprep.subr.mxu0 0.0
          %601 = vmatpush1.msra.mxu0 %v392
          %602 = vmatprep.subr.mxu0 0.0
          %603 = vmatpush1.msra.mxu0 %v391
          %604 = vmatprep.subr.mxu0 0.0
          %605 = vmatpush1.msra.mxu0 %v390
          %606 = vmatprep.subr.mxu0 0.0
          %607 = vmatpush1.msra.mxu0 %v389
          %608 = vmatprep.subr.mxu0 0.0
          %609 = vmatpush1.msra.mxu0 %v388
          %610 = vmatprep.subr.mxu0 0.0
          %611 = vmatpush2.msra.mxu0 %v419
          %612 = vmatprep.subr.mxu0 0.0
          %613 = vmatpush2.msra.mxu0 %v418
          %614 = vmatprep.subr.mxu0 0.0
          %615 = vmatpush2.msra.mxu0 %v417
          %616 = vmatprep.subr.mxu0 0.0
          %617 = vmatpush2.msra.mxu0 %v416
          %618 = vmatprep.subr.mxu0 0.0
          %619 = vmatpush2.msra.mxu0 %v415
          %620 = vmatprep.subr.mxu0 0.0
          %621 = vmatpush2.msra.mxu0 %v414
          %622 = vmatprep.subr.mxu0 0.0
          %623 = vmatpush2.msra.mxu0 %v413
          %624 = vmatprep.subr.mxu0 0.0
          %625 = vmatpush2.msra.mxu0 %v412
          %626 = vmatprep.subr.mxu0 0.0
          %627 = vmatpush2.msra.mxu0 %v411
          %628 = vmatprep.subr.mxu0 0.0
          %629 = vmatpush2.msra.mxu0 %v410
          %630 = vmatprep.subr.mxu0 0.0
          %631 = vmatpush2.msra.mxu0 %v409
          %632 = vmatprep.subr.mxu0 0.0
          %633 = vmatpush2.msra.mxu0 %v408
          %634 = vmatprep.subr.mxu0 0.0
          %635 = vmatpush2.msra.mxu0 %v407
          %636 = vmatprep.subr.mxu0 0.0
          %637 = vmatpush2.msra.mxu0 %v406
          %638 = vmatprep.subr.mxu0 0.0
          %639 = vmatpush2.msra.mxu0 %v405
          %640 = vmatprep.subr.mxu0 0.0
          %641 = vmatpush2.msra.mxu0 %v404
          %642 = vmatprep.mubr.f32.mxu0 %v438
          %643 = vmatmul.mubr.f32.gmra.mxu0 %v436
          %v644 = vpop.f32.mrf.mxu0
          %v645 = vadd.f32 %v575, %v644
          %v646 = vpop.f32.mrf.mxu0
          %647 = vdwg.mxu0
          %v648 = vadd.f32 %v507, %v645
          %vm649 = vcmask 254976
          %650 = vst.msk [vmem:[#allocation2] sm:$0x3] %vm649, %v648
          %v651 = vld [vmem:[#allocation3] sm:$0x3]
          %v653 = vcombine.high %v355, %v355
          %v655 = vunpack.c.l.s4 1983009808
          %v656 = vunpack.c.0.s8 %v655
          %v657 = vlaneseq
          %v658 = vshrl.u32 %v657, 7
          %v659 = vsub.s32 %v656, %v658
          %v660 = vrot.slane %v355, %v659
          %v662 = vunpack.c.l.s4 1983009808
          %v663 = vunpack.c.0.s8 %v662
          %v664 = vlaneseq
          %v665 = vshrl.u32 %v664, 7
          %v666 = vsub.s32 %v663, %v665
          %v667 = vrot.slane %v653, %v666
          %v668 = vcombine.high %v660, %v660
          %v669 = vcombine.high %v667, %v667
          %674 = vmatprep.subr.mxu0 0.0
          %675 = vmatpush1.msra.mxu0 %v371
          %676 = vmatprep.subr.mxu0 0.0
          %677 = vmatpush1.msra.mxu0 %v370
          %678 = vmatprep.subr.mxu0 0.0
          %679 = vmatpush1.msra.mxu0 %v369
          %680 = vmatprep.subr.mxu0 0.0
          %681 = vmatpush1.msra.mxu0 %v368
          %682 = vmatprep.subr.mxu0 0.0
          %683 = vmatpush1.msra.mxu0 %v367
          %684 = vmatprep.subr.mxu0 0.0
          %685 = vmatpush1.msra.mxu0 %v366
          %686 = vmatprep.subr.mxu0 0.0
          %687 = vmatpush1.msra.mxu0 %v365
          %688 = vmatprep.subr.mxu0 0.0
          %689 = vmatpush1.msra.mxu0 %v364
          %690 = vmatprep.subr.mxu0 0.0
          %691 = vmatpush1.msra.mxu0 %v363
          %692 = vmatprep.subr.mxu0 0.0
          %693 = vmatpush1.msra.mxu0 %v362
          %694 = vmatprep.subr.mxu0 0.0
          %695 = vmatpush1.msra.mxu0 %v361
          %696 = vmatprep.subr.mxu0 0.0
          %697 = vmatpush1.msra.mxu0 %v360
          %698 = vmatprep.subr.mxu0 0.0
          %699 = vmatpush1.msra.mxu0 %v359
          %700 = vmatprep.subr.mxu0 0.0
          %701 = vmatpush1.msra.mxu0 %v358
          %702 = vmatprep.subr.mxu0 0.0
          %703 = vmatpush1.msra.mxu0 %v357
          %704 = vmatprep.subr.mxu0 0.0
          %705 = vmatpush1.msra.mxu0 %v356
          %706 = vmatprep.subr.mxu0 0.0
          %707 = vmatpush2.msra.mxu0 %v387
          %708 = vmatprep.subr.mxu0 0.0
          %709 = vmatpush2.msra.mxu0 %v386
          %710 = vmatprep.subr.mxu0 0.0
          %711 = vmatpush2.msra.mxu0 %v385
          %712 = vmatprep.subr.mxu0 0.0
          %713 = vmatpush2.msra.mxu0 %v384
          %714 = vmatprep.subr.mxu0 0.0
          %715 = vmatpush2.msra.mxu0 %v383
          %716 = vmatprep.subr.mxu0 0.0
          %717 = vmatpush2.msra.mxu0 %v382
          %718 = vmatprep.subr.mxu0 0.0
          %719 = vmatpush2.msra.mxu0 %v381
          %720 = vmatprep.subr.mxu0 0.0
          %721 = vmatpush2.msra.mxu0 %v380
          %722 = vmatprep.subr.mxu0 0.0
          %723 = vmatpush2.msra.mxu0 %v379
          %724 = vmatprep.subr.mxu0 0.0
          %725 = vmatpush2.msra.mxu0 %v378
          %726 = vmatprep.subr.mxu0 0.0
          %727 = vmatpush2.msra.mxu0 %v377
          %728 = vmatprep.subr.mxu0 0.0
          %729 = vmatpush2.msra.mxu0 %v376
          %730 = vmatprep.subr.mxu0 0.0
          %731 = vmatpush2.msra.mxu0 %v375
          %732 = vmatprep.subr.mxu0 0.0
          %733 = vmatpush2.msra.mxu0 %v374
          %734 = vmatprep.subr.mxu0 0.0
          %735 = vmatpush2.msra.mxu0 %v373
          %736 = vmatprep.subr.mxu0 0.0
          %737 = vmatpush2.msra.mxu0 %v372
          %738 = vmatprep.mubr.f32.mxu0 %v668
          %739 = vmatmul.mubr.f32.gmra.mxu0 %v660
          %v740 = vpop.f32.mrf.mxu0
          %v741 = vadd.f32 0.0, %v740
          %v742 = vpop.f32.mrf.mxu0
          %743 = vdwg.mxu0
          %744 = vmatprep.subr.mxu0 0.0
          %745 = vmatpush1.msra.mxu0 %v403
          %746 = vmatprep.subr.mxu0 0.0
          %747 = vmatpush1.msra.mxu0 %v402
          %748 = vmatprep.subr.mxu0 0.0
          %749 = vmatpush1.msra.mxu0 %v401
          %750 = vmatprep.subr.mxu0 0.0
          %751 = vmatpush1.msra.mxu0 %v400
          %752 = vmatprep.subr.mxu0 0.0
          %753 = vmatpush1.msra.mxu0 %v399
          %754 = vmatprep.subr.mxu0 0.0
          %755 = vmatpush1.msra.mxu0 %v398
          %756 = vmatprep.subr.mxu0 0.0
          %757 = vmatpush1.msra.mxu0 %v397
          %758 = vmatprep.subr.mxu0 0.0
          %759 = vmatpush1.msra.mxu0 %v396
          %760 = vmatprep.subr.mxu0 0.0
          %761 = vmatpush1.msra.mxu0 %v395
          %762 = vmatprep.subr.mxu0 0.0
          %763 = vmatpush1.msra.mxu0 %v394
          %764 = vmatprep.subr.mxu0 0.0
          %765 = vmatpush1.msra.mxu0 %v393
          %766 = vmatprep.subr.mxu0 0.0
          %767 = vmatpush1.msra.mxu0 %v392
          %768 = vmatprep.subr.mxu0 0.0
          %769 = vmatpush1.msra.mxu0 %v391
          %770 = vmatprep.subr.mxu0 0.0
          %771 = vmatpush1.msra.mxu0 %v390
          %772 = vmatprep.subr.mxu0 0.0
          %773 = vmatpush1.msra.mxu0 %v389
          %774 = vmatprep.subr.mxu0 0.0
          %775 = vmatpush1.msra.mxu0 %v388
          %776 = vmatprep.subr.mxu0 0.0
          %777 = vmatpush2.msra.mxu0 %v419
          %778 = vmatprep.subr.mxu0 0.0
          %779 = vmatpush2.msra.mxu0 %v418
          %780 = vmatprep.subr.mxu0 0.0
          %781 = vmatpush2.msra.mxu0 %v417
          %782 = vmatprep.subr.mxu0 0.0
          %783 = vmatpush2.msra.mxu0 %v416
          %784 = vmatprep.subr.mxu0 0.0
          %785 = vmatpush2.msra.mxu0 %v415
          %786 = vmatprep.subr.mxu0 0.0
          %787 = vmatpush2.msra.mxu0 %v414
          %788 = vmatprep.subr.mxu0 0.0
          %789 = vmatpush2.msra.mxu0 %v413
          %790 = vmatprep.subr.mxu0 0.0
          %791 = vmatpush2.msra.mxu0 %v412
          %792 = vmatprep.subr.mxu0 0.0
          %793 = vmatpush2.msra.mxu0 %v411
          %794 = vmatprep.subr.mxu0 0.0
          %795 = vmatpush2.msra.mxu0 %v410
          %796 = vmatprep.subr.mxu0 0.0
          %797 = vmatpush2.msra.mxu0 %v409
          %798 = vmatprep.subr.mxu0 0.0
          %799 = vmatpush2.msra.mxu0 %v408
          %800 = vmatprep.subr.mxu0 0.0
          %801 = vmatpush2.msra.mxu0 %v407
          %802 = vmatprep.subr.mxu0 0.0
          %803 = vmatpush2.msra.mxu0 %v406
          %804 = vmatprep.subr.mxu0 0.0
          %805 = vmatpush2.msra.mxu0 %v405
          %806 = vmatprep.subr.mxu0 0.0
          %807 = vmatpush2.msra.mxu0 %v404
          %808 = vmatprep.mubr.f32.mxu0 %v669
          %809 = vmatmul.mubr.f32.gmra.mxu0 %v667
          %v810 = vpop.f32.mrf.mxu0
          %v811 = vadd.f32 %v741, %v810
          %v812 = vpop.f32.mrf.mxu0
          %813 = vdwg.mxu0
          %v814 = vadd.f32 %v651, %v811
          %815 = vst.msk [vmem:[#allocation3] sm:$0x3] %vm649, %v814
        $region52: #{tpu_custom_call.1} parent=43 // pred_fallthru
          _
        %p816 = scmp.eq.s32.totalorder %s23, 1
        %p817 = pnand %p338, %p816
        %p818 = pneg %p817
        // Predicated region
        $region53: #{tpu_custom_call.1} parent=43 // pred_check
          _
        $region54: #{tpu_custom_call.1} parent=43 // pred_check_branch
          %820 = sbr.rel (%p817) target = $region56
        $region55: #{tpu_custom_call.1} parent=43 // pred_region
          %v821 = vld [vmem:[#allocation6] sm:$0x1]
          %v822 = vld [vmem:[#allocation7] sm:$0x1]
          %v823 = vmul.f32 %v821, %v821
          %v824 = vmul.f32 %v823, 0.00048828125
          %v825 = vsub.f32 %v822, %v824
          %v826 = vrcp.pop 2047.0
          %v827 = vmul.f32 %v825, %v826
          %v828 = vrsqrt.pop %v827
          %v829 = vmul.f32 %v827, %v828
          %vm830 = vcmp.eq.f32.partialorder %v827, inf
          %v831 = vsel %vm830, %v827, %v829
          %vm832 = vcmp.eq.f32.partialorder %v827, 0.0
          %v833 = vand.u32 %v827, 2147483648
          %v834 = vsel %vm832, %v833, %v831
          %v835 = vld [vmem:[%s3] sm:$0x3]
          %v836 = vsub.f32 1.0, %v835
          %v837 = vmul.f32 %v834, 0.5
          %v839 = vlaneseq
          %v840 = vshrl.u32 %v839, 7
          %v841 = vsub.s32 0, %v840
          %v842 = vrot.slane %v837, %v841
          %v844 = vmul.f32 %v836, %v842
          %v845 = vld [vmem:[#allocation2] sm:$0x3]
          %v846 = vld [vmem:[#allocation3] sm:$0x3]
          %848 = vset.pattern.permute.xlu0 0
          %849 = vperm.xlu0 %848, %v844
          %v850 = vpop.permute.xlu0 %849
          %v852 = vmul.f32 %v850, %v846
          %v853 = vadd.f32 %v845, %v852
          %v854 = vld [vmem:[%s4] sm:$0x1]
          %v856 = vlaneseq
          %v857 = vshrl.u32 %v856, 7
          %v858 = vsub.s32 0, %v857
          %v859 = vrot.slane %v854, %v858
          %v861 = vadd.f32 %v853, %v859
          %vm862 = vcmp.gt.f32.partialorder %v861, 0.0
          %v863 = vld [vmem:[%s5] sm:$0x1]
          %v865 = vlaneseq
          %v866 = vshrl.u32 %v865, 7
          %v867 = vsub.s32 0, %v866
          %v868 = vrot.slane %v863, %v867
          %v870 = vsel %vm862, %v868, 0.0
          %vm871 = vcmask 254976
          %872 = vst.msk [vmem:[#allocation4] sm:$0x3] %vm871, %v870
        $region56: #{tpu_custom_call.1} parent=43 // pred_fallthru
          _
        %p873 = scmp.eq.s32.totalorder %s22, 1
        // Predicated region
        $region57: #{tpu_custom_call.1} parent=43 // pred_check
          %p874 = pneg %p873
        $region58: #{tpu_custom_call.1} parent=43 // pred_check_branch
          %876 = sbr.rel (%p874) target = $region60
        $region59: #{tpu_custom_call.1} parent=43 // pred_region
          %v877 = vld [vmem:[%s336] sm:$0xff]
          %v878 = vld [vmem:[%s336 + $0x8] sm:$0xff]
          %v879 = vld [vmem:[%s336 + $0x10] sm:$0xff]
          %v880 = vld [vmem:[%s336 + $0x18] sm:$0xff]
          %v881 = vld [vmem:[%s336 + $0x20] sm:$0xff]
          %v882 = vld [vmem:[%s336 + $0x28] sm:$0xff]
          %v883 = vld [vmem:[%s336 + $0x30] sm:$0xff]
          %v884 = vld [vmem:[%s336 + $0x38] sm:$0xff]
          %v885 = vld [vmem:[%s336 + $0x40] sm:$0xff]
          %v886 = vld [vmem:[%s336 + $0x48] sm:$0xff]
          %v887 = vld [vmem:[%s336 + $0x50] sm:$0xff]
          %v888 = vld [vmem:[%s336 + $0x58] sm:$0xff]
          %v889 = vld [vmem:[%s336 + $0x60] sm:$0xff]
          %v890 = vld [vmem:[%s336 + $0x68] sm:$0xff]
          %v891 = vld [vmem:[%s336 + $0x70] sm:$0xff]
          %v892 = vld [vmem:[%s336 + $0x78] sm:$0xff]
          %v893 = vld [vmem:[%s336 + $0x80] sm:$0xff]
          %v894 = vld [vmem:[%s336 + $0x88] sm:$0xff]
          %v895 = vld [vmem:[%s336 + $0x90] sm:$0xff]
          %v896 = vld [vmem:[%s336 + $0x98] sm:$0xff]
          %v897 = vld [vmem:[%s336 + $0xa0] sm:$0xff]
          %v898 = vld [vmem:[%s336 + $0xa8] sm:$0xff]
          %v899 = vld [vmem:[%s336 + $0xb0] sm:$0xff]
          %v900 = vld [vmem:[%s336 + $0xb8] sm:$0xff]
          %v901 = vld [vmem:[%s336 + $0xc0] sm:$0xff]
          %v902 = vld [vmem:[%s336 + $0xc8] sm:$0xff]
          %v903 = vld [vmem:[%s336 + $0xd0] sm:$0xff]
          %v904 = vld [vmem:[%s336 + $0xd8] sm:$0xff]
          %v905 = vld [vmem:[%s336 + $0xe0] sm:$0xff]
          %v906 = vld [vmem:[%s336 + $0xe8] sm:$0xff]
          %v907 = vld [vmem:[%s336 + $0xf0] sm:$0xff]
          %v908 = vld [vmem:[%s336 + $0xf8] sm:$0xff]
          %v909 = vld [vmem:[%s336 + $0x100] sm:$0xff]
          %v910 = vld [vmem:[%s336 + $0x108] sm:$0xff]
          %v911 = vld [vmem:[%s336 + $0x110] sm:$0xff]
          %v912 = vld [vmem:[%s336 + $0x118] sm:$0xff]
          %v913 = vld [vmem:[%s336 + $0x120] sm:$0xff]
          %v914 = vld [vmem:[%s336 + $0x128] sm:$0xff]
          %v915 = vld [vmem:[%s336 + $0x130] sm:$0xff]
          %v916 = vld [vmem:[%s336 + $0x138] sm:$0xff]
          %v917 = vld [vmem:[%s336 + $0x140] sm:$0xff]
          %v918 = vld [vmem:[%s336 + $0x148] sm:$0xff]
          %v919 = vld [vmem:[%s336 + $0x150] sm:$0xff]
          %v920 = vld [vmem:[%s336 + $0x158] sm:$0xff]
          %v921 = vld [vmem:[%s336 + $0x160] sm:$0xff]
          %v922 = vld [vmem:[%s336 + $0x168] sm:$0xff]
          %v923 = vld [vmem:[%s336 + $0x170] sm:$0xff]
          %v924 = vld [vmem:[%s336 + $0x178] sm:$0xff]
          %v925 = vld [vmem:[%s336 + $0x180] sm:$0xff]
          %v926 = vld [vmem:[%s336 + $0x188] sm:$0xff]
          %v927 = vld [vmem:[%s336 + $0x190] sm:$0xff]
          %v928 = vld [vmem:[%s336 + $0x198] sm:$0xff]
          %v929 = vld [vmem:[%s336 + $0x1a0] sm:$0xff]
          %v930 = vld [vmem:[%s336 + $0x1a8] sm:$0xff]
          %v931 = vld [vmem:[%s336 + $0x1b0] sm:$0xff]
          %v932 = vld [vmem:[%s336 + $0x1b8] sm:$0xff]
          %v933 = vld [vmem:[%s336 + $0x1c0] sm:$0xff]
          %v934 = vld [vmem:[%s336 + $0x1c8] sm:$0xff]
          %v935 = vld [vmem:[%s336 + $0x1d0] sm:$0xff]
          %v936 = vld [vmem:[%s336 + $0x1d8] sm:$0xff]
          %v937 = vld [vmem:[%s336 + $0x1e0] sm:$0xff]
          %v938 = vld [vmem:[%s336 + $0x1e8] sm:$0xff]
          %v939 = vld [vmem:[%s336 + $0x1f0] sm:$0xff]
          %v940 = vld [vmem:[%s336 + $0x1f8] sm:$0xff]
          %v941 = vld [vmem:[#allocation4] sm:$0x3]
          %v942 = vld [vmem:[#allocation5] sm:$0xf]
          %vm943 = vcmask 261120
          %v945 = vsel %vm943, %v941, 0
          %v948 = vsel %vm943, %v877, 0
          %v951 = vsel %vm943, %v878, 0
          %v954 = vsel %vm943, %v879, 0
          %v957 = vsel %vm943, %v880, 0
          %v960 = vsel %vm943, %v881, 0
          %v963 = vsel %vm943, %v882, 0
          %v966 = vsel %vm943, %v883, 0
          %v969 = vsel %vm943, %v884, 0
          %v972 = vsel %vm943, %v885, 0
          %v975 = vsel %vm943, %v886, 0
          %v978 = vsel %vm943, %v887, 0
          %v981 = vsel %vm943, %v888, 0
          %v984 = vsel %vm943, %v889, 0
          %v987 = vsel %vm943, %v890, 0
          %v990 = vsel %vm943, %v891, 0
          %v993 = vsel %vm943, %v892, 0
          %v996 = vsel %vm943, %v893, 0
          %v999 = vsel %vm943, %v894, 0
          %v1002 = vsel %vm943, %v895, 0
          %v1005 = vsel %vm943, %v896, 0
          %v1008 = vsel %vm943, %v897, 0
          %v1011 = vsel %vm943, %v898, 0
          %v1014 = vsel %vm943, %v899, 0
          %v1017 = vsel %vm943, %v900, 0
          %v1020 = vsel %vm943, %v901, 0
          %v1023 = vsel %vm943, %v902, 0
          %v1026 = vsel %vm943, %v903, 0
          %v1029 = vsel %vm943, %v904, 0
          %v1032 = vsel %vm943, %v905, 0
          %v1035 = vsel %vm943, %v906, 0
          %v1038 = vsel %vm943, %v907, 0
          %v1041 = vsel %vm943, %v908, 0
          %1043 = vmatprep.subr.mxu0 0.0
          %1044 = vmatpush1.xpose.msra.mxu0 %v993
          %1045 = vmatprep.subr.mxu0 0.0
          %1046 = vmatpush1.xpose.msra.mxu0 %v990
          %1047 = vmatprep.subr.mxu0 0.0
          %1048 = vmatpush1.xpose.msra.mxu0 %v987
          %1049 = vmatprep.subr.mxu0 0.0
          %1050 = vmatpush1.xpose.msra.mxu0 %v984
          %1051 = vmatprep.subr.mxu0 0.0
          %1052 = vmatpush1.xpose.msra.mxu0 %v981
          %1053 = vmatprep.subr.mxu0 0.0
          %1054 = vmatpush1.xpose.msra.mxu0 %v978
          %1055 = vmatprep.subr.mxu0 0.0
          %1056 = vmatpush1.xpose.msra.mxu0 %v975
          %1057 = vmatprep.subr.mxu0 0.0
          %1058 = vmatpush1.xpose.msra.mxu0 %v972
          %1059 = vmatprep.subr.mxu0 0.0
          %1060 = vmatpush1.xpose.msra.mxu0 %v969
          %1061 = vmatprep.subr.mxu0 0.0
          %1062 = vmatpush1.xpose.msra.mxu0 %v966
          %1063 = vmatprep.subr.mxu0 0.0
          %1064 = vmatpush1.xpose.msra.mxu0 %v963
          %1065 = vmatprep.subr.mxu0 0.0
          %1066 = vmatpush1.xpose.msra.mxu0 %v960
          %1067 = vmatprep.subr.mxu0 0.0
          %1068 = vmatpush1.xpose.msra.mxu0 %v957
          %1069 = vmatprep.subr.mxu0 0.0
          %1070 = vmatpush1.xpose.msra.mxu0 %v954
          %1071 = vmatprep.subr.mxu0 0.0
          %1072 = vmatpush1.xpose.msra.mxu0 %v951
          %1073 = vmatprep.subr.mxu0 0.0
          %1074 = vmatpush1.xpose.msra.mxu0 %v948
          %1075 = vmatprep.subr.mxu0 0.0
          %1076 = vmatpush2.xpose.msra.mxu0 %v1041
          %1077 = vmatprep.subr.mxu0 0.0
          %1078 = vmatpush2.xpose.msra.mxu0 %v1038
          %1079 = vmatprep.subr.mxu0 0.0
          %1080 = vmatpush2.xpose.msra.mxu0 %v1035
          %1081 = vmatprep.subr.mxu0 0.0
          %1082 = vmatpush2.xpose.msra.mxu0 %v1032
          %1083 = vmatprep.subr.mxu0 0.0
          %1084 = vmatpush2.xpose.msra.mxu0 %v1029
          %1085 = vmatprep.subr.mxu0 0.0
          %1086 = vmatpush2.xpose.msra.mxu0 %v1026
          %1087 = vmatprep.subr.mxu0 0.0
          %1088 = vmatpush2.xpose.msra.mxu0 %v1023
          %1089 = vmatprep.subr.mxu0 0.0
          %1090 = vmatpush2.xpose.msra.mxu0 %v1020
          %1091 = vmatprep.subr.mxu0 0.0
          %1092 = vmatpush2.xpose.msra.mxu0 %v1017
          %1093 = vmatprep.subr.mxu0 0.0
          %1094 = vmatpush2.xpose.msra.mxu0 %v1014
          %1095 = vmatprep.subr.mxu0 0.0
          %1096 = vmatpush2.xpose.msra.mxu0 %v1011
          %1097 = vmatprep.subr.mxu0 0.0
          %1098 = vmatpush2.xpose.msra.mxu0 %v1008
          %1099 = vmatprep.subr.mxu0 0.0
          %1100 = vmatpush2.xpose.msra.mxu0 %v1005
          %1101 = vmatprep.subr.mxu0 0.0
          %1102 = vmatpush2.xpose.msra.mxu0 %v1002
          %1103 = vmatprep.subr.mxu0 0.0
          %1104 = vmatpush2.xpose.msra.mxu0 %v999
          %1105 = vmatprep.subr.mxu0 0.0
          %1106 = vmatpush2.xpose.msra.mxu0 %v996
          %1107 = vmatprep.mubr.f32.mxu0 0.0
          %1108 = vmatmul.mubr.f32.gmra.mxu0 %v945
          %v1109 = vpop.f32.mrf.mxu0
          %v1110 = vadd.f32 0.0, %v1109
          %v1111 = vpop.f32.mrf.mxu0
          %v1112 = vadd.f32 0.0, %v1111
          %1113 = vdwg.mxu0
          %v1114 = vmul.f32 %v1110, %v1110
          %v1115 = vmul.f32 %v1112, %v1112
          %v1118 = vcombine.low %v1114, %v1115
          %v1120 = vunpack.c.l.s4 1983009808
          %v1121 = vunpack.c.0.s8 %v1120
          %v1122 = vlaneseq
          %v1123 = vshrl.u32 %v1122, 7
          %v1124 = vsub.s32 %v1121, %v1123
          %v1125 = vrot.slane %v1118, %v1124
          %v1127 = vadd.f32 %v942, %v1125
          %v1129 = vsel %vm943, %v909, 0
          %v1132 = vsel %vm943, %v910, 0
          %v1135 = vsel %vm943, %v911, 0
          %v1138 = vsel %vm943, %v912, 0
          %v1141 = vsel %vm943, %v913, 0
          %v1144 = vsel %vm943, %v914, 0
          %v1147 = vsel %vm943, %v915, 0
          %v1150 = vsel %vm943, %v916, 0
          %v1153 = vsel %vm943, %v917, 0
          %v1156 = vsel %vm943, %v918, 0
          %v1159 = vsel %vm943, %v919, 0
          %v1162 = vsel %vm943, %v920, 0
          %v1165 = vsel %vm943, %v921, 0
          %v1168 = vsel %vm943, %v922, 0
          %v1171 = vsel %vm943, %v923, 0
          %v1174 = vsel %vm943, %v924, 0
          %v1177 = vsel %vm943, %v925, 0
          %v1180 = vsel %vm943, %v926, 0
          %v1183 = vsel %vm943, %v927, 0
          %v1186 = vsel %vm943, %v928, 0
          %v1189 = vsel %vm943, %v929, 0
          %v1192 = vsel %vm943, %v930, 0
          %v1195 = vsel %vm943, %v931, 0
          %v1198 = vsel %vm943, %v932, 0
          %v1201 = vsel %vm943, %v933, 0
          %v1204 = vsel %vm943, %v934, 0
          %v1207 = vsel %vm943, %v935, 0
          %v1210 = vsel %vm943, %v936, 0
          %v1213 = vsel %vm943, %v937, 0
          %v1216 = vsel %vm943, %v938, 0
          %v1219 = vsel %vm943, %v939, 0
          %v1222 = vsel %vm943, %v940, 0
          %1224 = vmatprep.subr.mxu0 0.0
          %1225 = vmatpush1.xpose.msra.mxu0 %v1174
          %1226 = vmatprep.subr.mxu0 0.0
          %1227 = vmatpush1.xpose.msra.mxu0 %v1171
          %1228 = vmatprep.subr.mxu0 0.0
          %1229 = vmatpush1.xpose.msra.mxu0 %v1168
          %1230 = vmatprep.subr.mxu0 0.0
          %1231 = vmatpush1.xpose.msra.mxu0 %v1165
          %1232 = vmatprep.subr.mxu0 0.0
          %1233 = vmatpush1.xpose.msra.mxu0 %v1162
          %1234 = vmatprep.subr.mxu0 0.0
          %1235 = vmatpush1.xpose.msra.mxu0 %v1159
          %1236 = vmatprep.subr.mxu0 0.0
          %1237 = vmatpush1.xpose.msra.mxu0 %v1156
          %1238 = vmatprep.subr.mxu0 0.0
          %1239 = vmatpush1.xpose.msra.mxu0 %v1153
          %1240 = vmatprep.subr.mxu0 0.0
          %1241 = vmatpush1.xpose.msra.mxu0 %v1150
          %1242 = vmatprep.subr.mxu0 0.0
          %1243 = vmatpush1.xpose.msra.mxu0 %v1147
          %1244 = vmatprep.subr.mxu0 0.0
          %1245 = vmatpush1.xpose.msra.mxu0 %v1144
          %1246 = vmatprep.subr.mxu0 0.0
          %1247 = vmatpush1.xpose.msra.mxu0 %v1141
          %1248 = vmatprep.subr.mxu0 0.0
          %1249 = vmatpush1.xpose.msra.mxu0 %v1138
          %1250 = vmatprep.subr.mxu0 0.0
          %1251 = vmatpush1.xpose.msra.mxu0 %v1135
          %1252 = vmatprep.subr.mxu0 0.0
          %1253 = vmatpush1.xpose.msra.mxu0 %v1132
          %1254 = vmatprep.subr.mxu0 0.0
          %1255 = vmatpush1.xpose.msra.mxu0 %v1129
          %1256 = vmatprep.subr.mxu0 0.0
          %1257 = vmatpush2.xpose.msra.mxu0 %v1222
          %1258 = vmatprep.subr.mxu0 0.0
          %1259 = vmatpush2.xpose.msra.mxu0 %v1219
          %1260 = vmatprep.subr.mxu0 0.0
          %1261 = vmatpush2.xpose.msra.mxu0 %v1216
          %1262 = vmatprep.subr.mxu0 0.0
          %1263 = vmatpush2.xpose.msra.mxu0 %v1213
          %1264 = vmatprep.subr.mxu0 0.0
          %1265 = vmatpush2.xpose.msra.mxu0 %v1210
          %1266 = vmatprep.subr.mxu0 0.0
          %1267 = vmatpush2.xpose.msra.mxu0 %v1207
          %1268 = vmatprep.subr.mxu0 0.0
          %1269 = vmatpush2.xpose.msra.mxu0 %v1204
          %1270 = vmatprep.subr.mxu0 0.0
          %1271 = vmatpush2.xpose.msra.mxu0 %v1201
          %1272 = vmatprep.subr.mxu0 0.0
          %1273 = vmatpush2.xpose.msra.mxu0 %v1198
          %1274 = vmatprep.subr.mxu0 0.0
          %1275 = vmatpush2.xpose.msra.mxu0 %v1195
          %1276 = vmatprep.subr.mxu0 0.0
          %1277 = vmatpush2.xpose.msra.mxu0 %v1192
          %1278 = vmatprep.subr.mxu0 0.0
          %1279 = vmatpush2.xpose.msra.mxu0 %v1189
          %1280 = vmatprep.subr.mxu0 0.0
          %1281 = vmatpush2.xpose.msra.mxu0 %v1186
          %1282 = vmatprep.subr.mxu0 0.0
          %1283 = vmatpush2.xpose.msra.mxu0 %v1183
          %1284 = vmatprep.subr.mxu0 0.0
          %1285 = vmatpush2.xpose.msra.mxu0 %v1180
          %1286 = vmatprep.subr.mxu0 0.0
          %1287 = vmatpush2.xpose.msra.mxu0 %v1177
          %1288 = vmatprep.mubr.f32.mxu0 0.0
          %1289 = vmatmul.mubr.f32.gmra.mxu0 %v945
          %v1290 = vpop.f32.mrf.mxu0
          %v1291 = vadd.f32 0.0, %v1290
          %v1292 = vpop.f32.mrf.mxu0
          %v1293 = vadd.f32 0.0, %v1292
          %1294 = vdwg.mxu0
          %v1295 = vmul.f32 %v1291, %v1291
          %v1296 = vmul.f32 %v1293, %v1293
          %v1299 = vcombine.low %v1295, %v1296
          %v1301 = vunpack.c.l.s4 1983009808
          %v1302 = vunpack.c.0.s8 %v1301
          %v1303 = vlaneseq
          %v1304 = vshrl.u32 %v1303, 7
          %v1305 = vsub.s32 %v1302, %v1304
          %v1306 = vrot.slane %v1299, %v1305
          %v1308 = vadd.f32 %v1127, %v1306
          %1309 = vst [vmem:[#allocation5] sm:$0xf] %v1308
        $region60: #{tpu_custom_call.1} parent=43 // pred_fallthru
          _
        %p1310 = pnand %p873, %p816
        %p1311 = pneg %p1310
        // Predicated region
        $region61: #{tpu_custom_call.1} parent=43 // pred_check
          _
        $region62: #{tpu_custom_call.1} parent=43 // pred_check_branch
          %1313 = sbr.rel (%p1310) target = $region64
        $region63: #{tpu_custom_call.1} parent=43 // pred_region
          %v1314 = vld [vmem:[#allocation5] sm:$0xf]
          %v1315 = vrsqrt.pop %v1314
          %v1316 = vmul.f32 %v1314, %v1315
          %vm1317 = vcmp.eq.f32.partialorder %v1314, inf
          %v1318 = vsel %vm1317, %v1314, %v1316
          %vm1319 = vcmp.eq.f32.partialorder %v1314, 0.0
          %v1320 = vand.u32 %v1314, 2147483648
          %v1321 = vsel %vm1319, %v1320, %v1318
          %v1322 = vsub.f32 %v1321, 1.0
          %v1323 = vmul.f32 %v1322, %v1322
          %v1326 = vunpack.c.l.s4 1983009808
          %v1327 = vunpack.c.0.s8 %v1326
          %v1328 = vlaneseq
          %v1329 = vshrl.u32 %v1328, 7
          %v1330 = vsub.s32 %v1327, %v1329
          %v1331 = vrot.slane %v1323, %v1330
          %v1332 = vcombine.high %v1331, %v1331
          %vm1335 = vcmask 1041408
          %v1336 = vsel %vm1335, %v1331, 0.0
          %v1337 = vsel %vm1335, %v1332, 0.0
          %v1338 = vadd.f32 %v1336, %v1337
          %1339 = vadd.xlane.f32.xlu0 %v1338
          %v1340 = vpop.xlane.xlu0 %1339
          %v1341 = vrot.slane %v1340, 4
          %v1342 = vadd.f32 %v1340, %v1341
          %v1343 = vrot.slane %v1342, 2
          %v1344 = vadd.f32 %v1342, %v1343
          %v1345 = vrot.slane %v1344, 1
          %v1346 = vadd.f32 %v1344, %v1345
          %s1347 = vtos %v1346
          %v1348 = vrcp.pop 512.0
          %s1349 = vtos %v1348
          %s1350 = smul.f32 %s1347, %s1349
          %s1351 = smul.f32 %s1350, 10.0
          %v1352 = vstv %s1351
          %vm1353 = vcmask 0
          %1354 = vst.msk [vmem:[#allocation8] sm:$0x1] %vm1353, %v1352
        $region64: #{tpu_custom_call.1} parent=43 // pred_fallthru
          _
        // Predicated region
        $region65: #{tpu_custom_call.1} parent=43 // pred_check
          %p1355 = pneg %p196
        $region66: #{tpu_custom_call.1} parent=43 // pred_check_branch
          %1357 = sbr.rel (%p1355) target = $region68
        $region67: #{tpu_custom_call.1} parent=43 // pred_region
          %s1359 = ssub.s32 16, 16
          %1360 = vsyncadd [#allocation9], %s1359
          %s1362 = sshll.u32 [#allocation8], 4
          %s1363 = int_to_ptr.vmem [resolvable:$true] %s1362
          %1365 = dma.vmem_to_hbm [thread:$0]  %s1363, 16, %s6, [#allocation9]
        $region68: #{tpu_custom_call.1} parent=43 // pred_fallthru
          _
        // Predicated region
        $region69: #{tpu_custom_call.1} parent=43 // pred_check
          %p1366 = pneg %p196
        $region70: #{tpu_custom_call.1} parent=43 // pred_check_branch
          %1368 = sbr.rel (%p1366) target = $region72
        $region71: #{tpu_custom_call.1} parent=43 // pred_region
          %1369 = dma.done [#allocation9], 16
        $region72: #{tpu_custom_call.1} parent=43 // pred_fallthru
          _
      $region44: #{tpu_custom_call.1} parent=5 // pred_fallthru
        _
      %p1370 = scmp.le.s32.totalorder 2, %s13
      // Predicated region
      $region73: #{tpu_custom_call.1} parent=5 // pred_check
        %p1371 = pneg %p1370
      $region74: #{tpu_custom_call.1} parent=5 // pred_check_branch
        %1373 = sbr.rel (%p1371) target = $region76
      $region75: #{tpu_custom_call.1} parent=5 // pred_region
        %s1374 = ssub.s32 %s13, 2
      $region76: #{tpu_custom_call.1} parent=5 // pred_fallthru
        _
    $region6: #{tpu_custom_call.1} parent=1 // loop_footer
      %s17 = sadd.s32 1, %s13
    $region7: #{tpu_custom_call.1} parent=1 // loop_footer_branch
      %12 = sbr.rel target = $region3
    $region8: #{tpu_custom_call.1} parent=1 // loop_exit
      _
    %1375 = vsyncpa [#allocation9], 1
    %s1376 = scalar_lea.sflag [#allocation9], 1
    %1377 = vsyncpa %s1376, 1

</llo_original>
